<compile_context>
chip_gen: v6e
topology: v6e:2x2x1
jax: 0.10.0
libtpu: 0.0.40
codegen_flags: <defaults>
</compile_context>

<pallas_src>
import jax
import jax.numpy as jnp
from jax import lax
from jax.experimental import pallas as pl
from jax.experimental.pallas import tpu as pltpu


def _concurrent_kernel(res_ref, org_ref, mask_ref, w_ref, b_ref, out_ref):
    # res_ref  : (B, N, C)     res_x
    # org_ref  : (B, N, Dw)    origin_x (Dw == small_win == dim_in)
    # mask_ref : (N, N)        off-diagonal mask (0 on diag, 1 elsewhere)
    # w_ref    : (Dw, Di, Do)  weights_pool_x
    # b_ref    : (Dw, Do)      bias_pool_x
    # out_ref  : (B, Do, N)    transposed output
    r = res_ref[...].astype(jnp.float32)                            # (B, N, C)
    x = org_ref[...].astype(jnp.float32)                            # (B, N, Dw)
    b, n, _ = r.shape
    dw = x.shape[-1]

    # --- cosine-similarity graph (rows normalized first -> no N^2 divides) --
    inv_nrm = lax.rsqrt(jnp.sum(r * r, axis=-1, keepdims=True))     # (B, N, 1)
    rn = r * inv_nrm
    cos = jnp.einsum('bmc,bnc->bmn', rn, rn,
                     preferred_element_type=jnp.float32)            # (B, N, N)
    # zero the diagonal with one precomputed mask multiply (no iotas/compare)
    cos = cos * mask_ref[...][None, :, :]

    # --- per-graph min/max normalization (one reciprocal, N^2 muls) ---------
    mx = jnp.max(jnp.max(cos, axis=2, keepdims=True), axis=1, keepdims=True)
    mn = jnp.min(jnp.min(cos, axis=2, keepdims=True), axis=1, keepdims=True)
    adj = (cos - mn) * (jnp.float32(1.0) / (mx - mn))               # symmetric

    # --- symmetric normalization folded into the graph matmul ---------------
    # supports = D^-1/2 adj^T D^-1/2 ; adj == adj^T, so
    #   supports @ x = d * (adj @ (d * x))   (no transpose, no supports matrix)
    rowsum = jnp.sum(adj, axis=2, keepdims=True)                    # (B, N, 1)
    d = jnp.maximum(lax.rsqrt(rowsum), jnp.float32(1e-10))          # (B, N, 1)
    xg = d * jnp.einsum('bnm,bmc->bnc', adj, d * x,
                        preferred_element_type=jnp.float32)         # (B, N, Dw)

    # --- graph-conv tail: bias matmul + Dw unrolled tiny MXU matmuls --------
    #   out[n,o] = sum_d x[n,d]*bias[d,o] + sum_d x[n,d] * (xg[n,:] @ W[d])[o]
    x2 = x.reshape(b * n, dw)                                        # (B*N, Dw)
    g2 = xg.reshape(b * n, dw)                                       # (B*N, Dw)
    w = w_ref[...].astype(jnp.float32)                               # (Dw, Di, Do)
    acc = jnp.dot(x2, b_ref[...].astype(jnp.float32),
                  preferred_element_type=jnp.float32)                # (B*N, Do)
    for dd in range(dw):    # Dw is tiny & static -> unrolled, 8 MXU pushes
        acc = acc + x2[:, dd:dd + 1] * jnp.dot(
            g2, w[dd], preferred_element_type=jnp.float32)
    y = jnp.tanh(acc)                                                # (B*N, Do)

    # --- single transposed store: (B, Do, N) ---------------------------------
    y3 = y.reshape(b, n, -1)                                         # (B, N, Do)
    out_ref[...] = jnp.swapaxes(y3, 1, 2).astype(out_ref.dtype)
    # TODO(synk): nn.Dropout(0.5) is implemented as identity (eval-mode
    #             semantics); training-mode RNG dropout is not modeled.


def concurrent_forward(res_x, origin_x, weights_pool_x, bias_pool_x):
    B, N, C = res_x.shape
    _, _, Dw = origin_x.shape
    Dw_w, Di, Do = weights_pool_x.shape
    assert Dw == Dw_w, "origin_x feature dim must equal small_win"
    assert Dw == Di, "einsum('bni,bnio->bno') requires small_win == dim_in"
    assert bias_pool_x.shape == (Dw, Do)

    # Precomputed off-diagonal mask (0 on diag, 1 elsewhere): one (N, N) f32
    # multiply in the kernel replaces two (B, N, N) iotas + compare + where.
    offdiag = jnp.float32(1.0) - jnp.eye(N, dtype=jnp.float32)

    # Single grid step: whole batch in one invocation.  v5e/v6e are single-TC
    # (extra grid depth is pure per-step overhead); on v7x only CORE_PARALLEL
    # actually shards across the two TCs and at this size the split cost would
    # exceed the win.  If B grows, keep Bt large (fold graphs into one step)
    # and only add grid depth / CORE_PARALLEL once the per-chunk working set
    # approaches the scoped VMEM limit.
    out = pl.pallas_call(
        _concurrent_kernel,
        out_shape=jax.ShapeDtypeStruct((B, Do, N), jnp.float32),
        grid_spec=pltpu.PrefetchScalarGridSpec(
            num_scalar_prefetch=0,
            grid=(1,),
            in_specs=[
                pl.BlockSpec((B, N, C), lambda i: (0, 0, 0)),
                pl.BlockSpec((B, N, Dw), lambda i: (0, 0, 0)),
                pl.BlockSpec((N, N), lambda i: (0, 0)),
                pl.BlockSpec((Dw, Di, Do), lambda i: (0, 0, 0)),
                pl.BlockSpec((Dw, Do), lambda i: (0, 0)),
            ],
            out_specs=pl.BlockSpec((B, Do, N), lambda i: (0, 0, 0)),
        ),
        compiler_params=pltpu.CompilerParams(
            dimension_semantics=("arbitrary",)),
    )(res_x, origin_x, offdiag, weights_pool_x, bias_pool_x)

    return out  # already (B, dim_out, N)


def concurrent_reference(res_x, origin_x, W, bias):
    """Pure-JAX transcription of the PyTorch forward (for verification)."""
    learned = jnp.einsum('bmc,bnc->bmn', res_x, res_x)
    nrm = jnp.sqrt(jnp.sum(res_x * res_x, axis=-1, keepdims=True))
    denom = jnp.einsum('bmi,bni->bmn', nrm, nrm)
    cos = learned / denom
    eye = jnp.eye(res_x.shape[1], dtype=bool)[None]
    cos = jnp.where(eye, 0.0, cos)
    flat = cos.reshape(cos.shape[0], -1)
    mx = flat.max(-1, keepdims=True)
    mn = flat.min(-1, keepdims=True)
    adj = ((flat - mn) / (mx - mn)).reshape(cos.shape)
    rowsum = adj.sum(2)
    d = jnp.maximum(rowsum ** -0.5, 1e-10)
    supports = d[:, :, None] * jnp.swapaxes(adj, 1, 2) * d[:, None, :]
    x_g1 = jnp.einsum('bnm,bmc->bnc', supports, origin_x)
    weights_x = jnp.einsum('bnd,dio->bnio', origin_x, W)
    bias_x = origin_x @ bias
    out = jnp.tanh(jnp.einsum('bni,bnio->bno', x_g1, weights_x) + bias_x)
    return jnp.swapaxes(out, 1, 2)


if __name__ == "__main__":
    # Module hyper-params: dim(num_node)=16, small_win=dim_in=8, dim_out=4
    B, N, C = 2, 16, 8
    SMALL_WIN, DIM_IN, DIM_OUT = 8, 8, 4

    key = jax.random.PRNGKey(0)
    k1, k2, k3, k4 = jax.random.split(key, 4)
    res_x = jax.random.normal(k1, (B, N, C), dtype=jnp.float32)
    origin_x = jax.random.normal(k2, (B, N, SMALL_WIN), dtype=jnp.float32)
    # Deterministic parameter init (torch.FloatTensor(...) is uninitialized;
    # we use a fixed random init instead).
    weights_pool_x = 0.1 * jax.random.normal(
        k3, (SMALL_WIN, DIM_IN, DIM_OUT), dtype=jnp.float32)
    bias_pool_x = 0.1 * jax.random.normal(
        k4, (SMALL_WIN, DIM_OUT), dtype=jnp.float32)

    out = concurrent_forward(res_x, origin_x, weights_pool_x, bias_pool_x)
    out = jax.block_until_ready(out)

    ref = concurrent_reference(res_x, origin_x, weights_pool_x, bias_pool_x)
    assert out.shape == (B, DIM_OUT, N), out.shape
    # Tolerance covers f32 reassociation from the folded degree scaling and
    # row-normalized gram (observed differences are ~1e-5).
    assert jnp.allclose(out, ref, rtol=5e-4, atol=5e-4), (
        float(jnp.max(jnp.abs(out - ref))))

    print("KERNEL_OK")
</pallas_src>

<mosaic_0001>
module attributes {stable_mosaic.version = 11 : i64} {
  func.func @_concurrent_kernel(%arg0: i32, %arg1: memref<2x16x8xf32, #tpu.memory_space<vmem>>, %arg2: memref<2x16x8xf32, #tpu.memory_space<vmem>>, %arg3: memref<16x16xf32, #tpu.memory_space<vmem>>, %arg4: memref<8x8x4xf32, #tpu.memory_space<vmem>>, %arg5: memref<8x4xf32, #tpu.memory_space<vmem>>, %arg6: memref<2x4x16xf32, #tpu.memory_space<vmem>>) attributes {dimension_semantics = [#tpu.dimension_semantics<arbitrary>], iteration_bounds = array<i64: 1>, scalar_prefetch = 0 : i64, scratch_operands = 0 : i64, tpu.core_type = #tpu.core_type<tc>, window_params = [{pipeline_mode = #tpu.pipeline_mode<synchronous>, transform_indices = @transform_0, window_bounds = array<i64: 2, 16, 8>}, {pipeline_mode = #tpu.pipeline_mode<synchronous>, transform_indices = @transform_1, window_bounds = array<i64: 2, 16, 8>}, {pipeline_mode = #tpu.pipeline_mode<synchronous>, transform_indices = @transform_2, window_bounds = array<i64: 16, 16>}, {pipeline_mode = #tpu.pipeline_mode<synchronous>, transform_indices = @transform_3, window_bounds = array<i64: 8, 8, 4>}, {pipeline_mode = #tpu.pipeline_mode<synchronous>, transform_indices = @transform_4, window_bounds = array<i64: 8, 4>}, {pipeline_mode = #tpu.pipeline_mode<synchronous>, transform_indices = @transform_5, window_bounds = array<i64: 2, 4, 16>}]} {
    %c0 = arith.constant 0 : index
    %c0_0 = arith.constant 0 : index
    %c0_1 = arith.constant 0 : index
    %0 = vector.load %arg1[%c0, %c0_0, %c0_1] : memref<2x16x8xf32, #tpu.memory_space<vmem>>, vector<2x16x8xf32>
    %c0_2 = arith.constant 0 : index
    %c0_3 = arith.constant 0 : index
    %c0_4 = arith.constant 0 : index
    %1 = vector.load %arg2[%c0_2, %c0_3, %c0_4] : memref<2x16x8xf32, #tpu.memory_space<vmem>>, vector<2x16x8xf32>
    %2 = arith.mulf %0, %0 : vector<2x16x8xf32>
    %cst = arith.constant dense<0.000000e+00> : vector<2x16xf32>
    %3 = vector.multi_reduction <add>, %2, %cst [2] : vector<2x16x8xf32> to vector<2x16xf32>
    %4 = vector.shape_cast %3 : vector<2x16xf32> to vector<2x16x1xf32>
    %5 = math.rsqrt %4 : vector<2x16x1xf32>
    %6 = vector.broadcast %5 : vector<2x16x1xf32> to vector<2x16x8xf32>
    %7 = arith.mulf %0, %6 : vector<2x16x8xf32>
    "tpu.trace_start"() <{level = 10 : i32, message = "bmc,bnc->bmn"}> : () -> ()
    %cst_5 = arith.constant dense<0.000000e+00> : vector<2x16x16xf32>
    %8 = tpu.matmul %7, %7, %cst_5 {dimension_numbers = #tpu.dot_dimension_numbers<[2], [2], [1], [1], [0, 0, 0, 1, 1, 1], [0], [0]>} : vector<2x16x8xf32>, vector<2x16x8xf32>, vector<2x16x16xf32> -> vector<2x16x16xf32>
    "tpu.trace_stop"() : () -> ()
    %c0_6 = arith.constant 0 : index
    %c0_7 = arith.constant 0 : index
    %9 = vector.load %arg3[%c0_6, %c0_7] : memref<16x16xf32, #tpu.memory_space<vmem>>, vector<16x16xf32>
    %10 = vector.shape_cast %9 : vector<16x16xf32> to vector<1x16x16xf32>
    %11 = vector.broadcast %10 : vector<1x16x16xf32> to vector<2x16x16xf32>
    %12 = arith.mulf %8, %11 : vector<2x16x16xf32>
    %cst_8 = arith.constant dense<0xFF800000> : vector<2x16xf32>
    %13 = vector.multi_reduction <maximumf>, %12, %cst_8 [2] : vector<2x16x16xf32> to vector<2x16xf32>
    %14 = vector.shape_cast %13 : vector<2x16xf32> to vector<2x16x1xf32>
    %cst_9 = arith.constant dense<0xFF800000> : vector<2x1xf32>
    %15 = vector.multi_reduction <maximumf>, %14, %cst_9 [1] : vector<2x16x1xf32> to vector<2x1xf32>
    %16 = vector.shape_cast %15 : vector<2x1xf32> to vector<2x1x1xf32>
    %cst_10 = arith.constant dense<0x7F800000> : vector<2x16xf32>
    %17 = vector.multi_reduction <minimumf>, %12, %cst_10 [2] : vector<2x16x16xf32> to vector<2x16xf32>
    %18 = vector.shape_cast %17 : vector<2x16xf32> to vector<2x16x1xf32>
    %cst_11 = arith.constant dense<0x7F800000> : vector<2x1xf32>
    %19 = vector.multi_reduction <minimumf>, %18, %cst_11 [1] : vector<2x16x1xf32> to vector<2x1xf32>
    %20 = vector.shape_cast %19 : vector<2x1xf32> to vector<2x1x1xf32>
    %21 = vector.broadcast %20 : vector<2x1x1xf32> to vector<2x16x16xf32>
    %22 = arith.subf %12, %21 : vector<2x16x16xf32>
    %23 = arith.subf %16, %20 : vector<2x1x1xf32>
    %cst_12 = arith.constant 1.000000e+00 : f32
    %24 = vector.broadcast %cst_12 : f32 to vector<2x1x1xf32>
    %25 = arith.divf %24, %23 : vector<2x1x1xf32>
    %26 = vector.broadcast %25 : vector<2x1x1xf32> to vector<2x16x16xf32>
    %27 = arith.mulf %22, %26 : vector<2x16x16xf32>
    %cst_13 = arith.constant dense<0.000000e+00> : vector<2x16xf32>
    %28 = vector.multi_reduction <add>, %27, %cst_13 [2] : vector<2x16x16xf32> to vector<2x16xf32>
    %29 = vector.shape_cast %28 : vector<2x16xf32> to vector<2x16x1xf32>
    %30 = math.rsqrt %29 : vector<2x16x1xf32>
    %cst_14 = arith.constant 1.000000e-10 : f32
    %31 = vector.broadcast %cst_14 : f32 to vector<2x16x1xf32>
    %32 = arith.maximumf %30, %31 : vector<2x16x1xf32>
    %33 = vector.broadcast %32 : vector<2x16x1xf32> to vector<2x16x8xf32>
    %34 = arith.mulf %33, %1 : vector<2x16x8xf32>
    "tpu.trace_start"() <{level = 10 : i32, message = "bnm,bmc->bnc"}> : () -> ()
    %cst_15 = arith.constant dense<0.000000e+00> : vector<2x16x8xf32>
    %35 = tpu.matmul %27, %34, %cst_15 {dimension_numbers = #tpu.dot_dimension_numbers<[2], [1], [1], [2], [0, 0, 0, 1, 1, 2], [0], [0]>} : vector<2x16x16xf32>, vector<2x16x8xf32>, vector<2x16x8xf32> -> vector<2x16x8xf32>
    "tpu.trace_stop"() : () -> ()
    %36 = vector.broadcast %32 : vector<2x16x1xf32> to vector<2x16x8xf32>
    %37 = arith.mulf %36, %35 : vector<2x16x8xf32>
    %38 = vector.shape_cast %1 : vector<2x16x8xf32> to vector<32x8xf32>
    %39 = vector.shape_cast %37 : vector<2x16x8xf32> to vector<32x8xf32>
    %c0_16 = arith.constant 0 : index
    %c0_17 = arith.constant 0 : index
    %c0_18 = arith.constant 0 : index
    %40 = vector.load %arg4[%c0_16, %c0_17, %c0_18] : memref<8x8x4xf32, #tpu.memory_space<vmem>>, vector<8x8x4xf32>
    %c0_19 = arith.constant 0 : index
    %c0_20 = arith.constant 0 : index
    %41 = vector.load %arg5[%c0_19, %c0_20] : memref<8x4xf32, #tpu.memory_space<vmem>>, vector<8x4xf32>
    %cst_21 = arith.constant dense<0.000000e+00> : vector<32x4xf32>
    %42 = tpu.matmul %38, %41, %cst_21 {dimension_numbers = #tpu.dot_dimension_numbers<[1], [0], [0], [1], [0, 0, 1, 1], [], []>} : vector<32x8xf32>, vector<8x4xf32>, vector<32x4xf32> -> vector<32x4xf32>
    %43 = vector.extract_strided_slice %38 {offsets = [0, 0], sizes = [32, 1], strides = [1, 1]} : vector<32x8xf32> to vector<32x1xf32>
    %44 = vector.extract_strided_slice %40 {offsets = [0, 0, 0], sizes = [1, 8, 4], strides = [1, 1, 1]} : vector<8x8x4xf32> to vector<1x8x4xf32>
    %45 = vector.shape_cast %44 : vector<1x8x4xf32> to vector<8x4xf32>
    %cst_22 = arith.constant dense<0.000000e+00> : vector<32x4xf32>
    %46 = tpu.matmul %39, %45, %cst_22 {dimension_numbers = #tpu.dot_dimension_numbers<[1], [0], [0], [1], [0, 0, 1, 1], [], []>} : vector<32x8xf32>, vector<8x4xf32>, vector<32x4xf32> -> vector<32x4xf32>
    %47 = vector.broadcast %43 : vector<32x1xf32> to vector<32x4xf32>
    %48 = arith.mulf %47, %46 : vector<32x4xf32>
    %49 = arith.addf %42, %48 : vector<32x4xf32>
    %50 = vector.extract_strided_slice %38 {offsets = [0, 1], sizes = [32, 1], strides = [1, 1]} : vector<32x8xf32> to vector<32x1xf32>
    %51 = vector.extract_strided_slice %40 {offsets = [1, 0, 0], sizes = [1, 8, 4], strides = [1, 1, 1]} : vector<8x8x4xf32> to vector<1x8x4xf32>
    %52 = vector.shape_cast %51 : vector<1x8x4xf32> to vector<8x4xf32>
    %cst_23 = arith.constant dense<0.000000e+00> : vector<32x4xf32>
    %53 = tpu.matmul %39, %52, %cst_23 {dimension_numbers = #tpu.dot_dimension_numbers<[1], [0], [0], [1], [0, 0, 1, 1], [], []>} : vector<32x8xf32>, vector<8x4xf32>, vector<32x4xf32> -> vector<32x4xf32>
    %54 = vector.broadcast %50 : vector<32x1xf32> to vector<32x4xf32>
    %55 = arith.mulf %54, %53 : vector<32x4xf32>
    %56 = arith.addf %49, %55 : vector<32x4xf32>
    %57 = vector.extract_strided_slice %38 {offsets = [0, 2], sizes = [32, 1], strides = [1, 1]} : vector<32x8xf32> to vector<32x1xf32>
    %58 = vector.extract_strided_slice %40 {offsets = [2, 0, 0], sizes = [1, 8, 4], strides = [1, 1, 1]} : vector<8x8x4xf32> to vector<1x8x4xf32>
    %59 = vector.shape_cast %58 : vector<1x8x4xf32> to vector<8x4xf32>
    %cst_24 = arith.constant dense<0.000000e+00> : vector<32x4xf32>
    %60 = tpu.matmul %39, %59, %cst_24 {dimension_numbers = #tpu.dot_dimension_numbers<[1], [0], [0], [1], [0, 0, 1, 1], [], []>} : vector<32x8xf32>, vector<8x4xf32>, vector<32x4xf32> -> vector<32x4xf32>
    %61 = vector.broadcast %57 : vector<32x1xf32> to vector<32x4xf32>
    %62 = arith.mulf %61, %60 : vector<32x4xf32>
    %63 = arith.addf %56, %62 : vector<32x4xf32>
    %64 = vector.extract_strided_slice %38 {offsets = [0, 3], sizes = [32, 1], strides = [1, 1]} : vector<32x8xf32> to vector<32x1xf32>
    %65 = vector.extract_strided_slice %40 {offsets = [3, 0, 0], sizes = [1, 8, 4], strides = [1, 1, 1]} : vector<8x8x4xf32> to vector<1x8x4xf32>
    %66 = vector.shape_cast %65 : vector<1x8x4xf32> to vector<8x4xf32>
    %cst_25 = arith.constant dense<0.000000e+00> : vector<32x4xf32>
    %67 = tpu.matmul %39, %66, %cst_25 {dimension_numbers = #tpu.dot_dimension_numbers<[1], [0], [0], [1], [0, 0, 1, 1], [], []>} : vector<32x8xf32>, vector<8x4xf32>, vector<32x4xf32> -> vector<32x4xf32>
    %68 = vector.broadcast %64 : vector<32x1xf32> to vector<32x4xf32>
    %69 = arith.mulf %68, %67 : vector<32x4xf32>
    %70 = arith.addf %63, %69 : vector<32x4xf32>
    %71 = vector.extract_strided_slice %38 {offsets = [0, 4], sizes = [32, 1], strides = [1, 1]} : vector<32x8xf32> to vector<32x1xf32>
    %72 = vector.extract_strided_slice %40 {offsets = [4, 0, 0], sizes = [1, 8, 4], strides = [1, 1, 1]} : vector<8x8x4xf32> to vector<1x8x4xf32>
    %73 = vector.shape_cast %72 : vector<1x8x4xf32> to vector<8x4xf32>
    %cst_26 = arith.constant dense<0.000000e+00> : vector<32x4xf32>
    %74 = tpu.matmul %39, %73, %cst_26 {dimension_numbers = #tpu.dot_dimension_numbers<[1], [0], [0], [1], [0, 0, 1, 1], [], []>} : vector<32x8xf32>, vector<8x4xf32>, vector<32x4xf32> -> vector<32x4xf32>
    %75 = vector.broadcast %71 : vector<32x1xf32> to vector<32x4xf32>
    %76 = arith.mulf %75, %74 : vector<32x4xf32>
    %77 = arith.addf %70, %76 : vector<32x4xf32>
    %78 = vector.extract_strided_slice %38 {offsets = [0, 5], sizes = [32, 1], strides = [1, 1]} : vector<32x8xf32> to vector<32x1xf32>
    %79 = vector.extract_strided_slice %40 {offsets = [5, 0, 0], sizes = [1, 8, 4], strides = [1, 1, 1]} : vector<8x8x4xf32> to vector<1x8x4xf32>
    %80 = vector.shape_cast %79 : vector<1x8x4xf32> to vector<8x4xf32>
    %cst_27 = arith.constant dense<0.000000e+00> : vector<32x4xf32>
    %81 = tpu.matmul %39, %80, %cst_27 {dimension_numbers = #tpu.dot_dimension_numbers<[1], [0], [0], [1], [0, 0, 1, 1], [], []>} : vector<32x8xf32>, vector<8x4xf32>, vector<32x4xf32> -> vector<32x4xf32>
    %82 = vector.broadcast %78 : vector<32x1xf32> to vector<32x4xf32>
    %83 = arith.mulf %82, %81 : vector<32x4xf32>
    %84 = arith.addf %77, %83 : vector<32x4xf32>
    %85 = vector.extract_strided_slice %38 {offsets = [0, 6], sizes = [32, 1], strides = [1, 1]} : vector<32x8xf32> to vector<32x1xf32>
    %86 = vector.extract_strided_slice %40 {offsets = [6, 0, 0], sizes = [1, 8, 4], strides = [1, 1, 1]} : vector<8x8x4xf32> to vector<1x8x4xf32>
    %87 = vector.shape_cast %86 : vector<1x8x4xf32> to vector<8x4xf32>
    %cst_28 = arith.constant dense<0.000000e+00> : vector<32x4xf32>
    %88 = tpu.matmul %39, %87, %cst_28 {dimension_numbers = #tpu.dot_dimension_numbers<[1], [0], [0], [1], [0, 0, 1, 1], [], []>} : vector<32x8xf32>, vector<8x4xf32>, vector<32x4xf32> -> vector<32x4xf32>
    %89 = vector.broadcast %85 : vector<32x1xf32> to vector<32x4xf32>
    %90 = arith.mulf %89, %88 : vector<32x4xf32>
    %91 = arith.addf %84, %90 : vector<32x4xf32>
    %92 = vector.extract_strided_slice %38 {offsets = [0, 7], sizes = [32, 1], strides = [1, 1]} : vector<32x8xf32> to vector<32x1xf32>
    %93 = vector.extract_strided_slice %40 {offsets = [7, 0, 0], sizes = [1, 8, 4], strides = [1, 1, 1]} : vector<8x8x4xf32> to vector<1x8x4xf32>
    %94 = vector.shape_cast %93 : vector<1x8x4xf32> to vector<8x4xf32>
    %cst_29 = arith.constant dense<0.000000e+00> : vector<32x4xf32>
    %95 = tpu.matmul %39, %94, %cst_29 {dimension_numbers = #tpu.dot_dimension_numbers<[1], [0], [0], [1], [0, 0, 1, 1], [], []>} : vector<32x8xf32>, vector<8x4xf32>, vector<32x4xf32> -> vector<32x4xf32>
    %96 = vector.broadcast %92 : vector<32x1xf32> to vector<32x4xf32>
    %97 = arith.mulf %96, %95 : vector<32x4xf32>
    %98 = arith.addf %91, %97 : vector<32x4xf32>
    %99 = math.tanh %98 : vector<32x4xf32>
    %100 = vector.shape_cast %99 : vector<32x4xf32> to vector<2x16x4xf32>
    %101 = tpu.transpose %100, [0, 2, 1] : vector<2x16x4xf32> -> vector<2x4x16xf32>
    %c0_30 = arith.constant 0 : index
    %c0_31 = arith.constant 0 : index
    %c0_32 = arith.constant 0 : index
    %102 = vector.load %arg6[%c0_30, %c0_31, %c0_32] : memref<2x4x16xf32, #tpu.memory_space<vmem>>, vector<2x4x16xf32>
    tpu.vector_store %arg6[%c0_30, %c0_31, %c0_32], %101 {strides = array<i32>} : memref<2x4x16xf32, #tpu.memory_space<vmem>>, vector<2x4x16xf32>,
    return
  }
  func.func @transform_0(%arg0: i32) -> (i32, i32, i32) {
    %c0_i32 = arith.constant 0 : i32
    %c0_i32_0 = arith.constant 0 : i32
    %c0_i32_1 = arith.constant 0 : i32
    %c0_i32_2 = arith.constant 0 : i32
    return %c0_i32, %c0_i32_0, %c0_i32_1 : i32, i32, i32
  }
  func.func @transform_1(%arg0: i32) -> (i32, i32, i32) {
    %c0_i32 = arith.constant 0 : i32
    %c0_i32_0 = arith.constant 0 : i32
    %c0_i32_1 = arith.constant 0 : i32
    %c0_i32_2 = arith.constant 0 : i32
    return %c0_i32, %c0_i32_0, %c0_i32_1 : i32, i32, i32
  }
  func.func @transform_2(%arg0: i32) -> (i32, i32) {
    %c0_i32 = arith.constant 0 : i32
    %c0_i32_0 = arith.constant 0 : i32
    %c0_i32_1 = arith.constant 0 : i32
    return %c0_i32, %c0_i32_0 : i32, i32
  }
  func.func @transform_3(%arg0: i32) -> (i32, i32, i32) {
    %c0_i32 = arith.constant 0 : i32
    %c0_i32_0 = arith.constant 0 : i32
    %c0_i32_1 = arith.constant 0 : i32
    %c0_i32_2 = arith.constant 0 : i32
    return %c0_i32, %c0_i32_0, %c0_i32_1 : i32, i32, i32
  }
  func.func @transform_4(%arg0: i32) -> (i32, i32) {
    %c0_i32 = arith.constant 0 : i32
    %c0_i32_0 = arith.constant 0 : i32
    %c0_i32_1 = arith.constant 0 : i32
    return %c0_i32, %c0_i32_0 : i32, i32
  }
  func.func @transform_5(%arg0: i32) -> (i32, i32, i32) {
    %c0_i32 = arith.constant 0 : i32
    %c0_i32_0 = arith.constant 0 : i32
    %c0_i32_1 = arith.constant 0 : i32
    %c0_i32_2 = arith.constant 0 : i32
    return %c0_i32, %c0_i32_0, %c0_i32_1 : i32, i32, i32
  }
}

</mosaic_0001>

<llo_original>
// kernel: tpu_custom_call.1
$region0: #{tpu_custom_call.1}
  #allocation0 [shape = 'u32[]', space=smem, size = 0x4, offset = 0x4, fixed_abs, tag = 'smem constant byte address 0x4 - core index']
  #allocation1 [shape = 'u32[144,128]{1,0:T(1,128)}', space=vmem, size = 0x12000, scoped, tag = 'internal scratch']
  %s0 = inlined_call_operand.vmem [shape: f32[2,16,8], index: 0, kind: input, shape index: {}]
  %s1 = inlined_call_operand.vmem [shape: f32[2,16,8], index: 1, kind: input, shape index: {}]
  %s2 = inlined_call_operand.vmem [shape: f32[16,16], index: 2, kind: input, shape index: {}]
  %s3 = inlined_call_operand.vmem [shape: f32[8,8,4], index: 3, kind: input, shape index: {}]
  %s4 = inlined_call_operand.vmem [shape: f32[8,4], index: 4, kind: input, shape index: {}]
  %s5 = inlined_call_operand.hbm [shape: f32[2,4,16], index: 5, kind: output, shape index: {}]
  %s6 = sld [smem:[#allocation0]]
  $region30: #{tpu_custom_call.1} parent=0
    _
  %s8 = ssub.s32 1, %s6
  %s9 = scalar_select 0, %s8, %s6
  $region1: #{tpu_custom_call.1} parent=0
    #allocation2 [shape = 'u8[4096]{0}', space=vmem, size = 0x1000, scoped, tag = 'output window, operand 0, single buffered']
    #allocation3 [shape = 's32[1]{0}', space=sflag, size = 0x4, scoped, tag = 'scoped memory for tpu_custom_call.1']
    %10 = vsyncpa [#allocation3], 0
    // Predicated region
    $region2: #{tpu_custom_call.1} parent=1 // pred_check
      _
    $region3: #{tpu_custom_call.1} parent=1 // pred_check_branch
      %12 = sbr.rel (0) target = $region5
    $region4: #{tpu_custom_call.1} parent=1 // pred_region
      _
    $region5: #{tpu_custom_call.1} parent=1 // pred_fallthru
      _
    // Predicated region
    $region6: #{tpu_custom_call.1} parent=1 // pred_check
      _
    $region7: #{tpu_custom_call.1} parent=1 // pred_check_branch
      %14 = sbr.rel (0) target = $region9
    $region8: #{tpu_custom_call.1} parent=1 // pred_region
      _
    $region9: #{tpu_custom_call.1} parent=1 // pred_fallthru
      _
    // Predicated region
    $region10: #{tpu_custom_call.1} parent=1 // pred_check
      _
    $region11: #{tpu_custom_call.1} parent=1 // pred_check_branch
      %16 = sbr.rel (0) target = $region13
    $region12: #{tpu_custom_call.1} parent=1 // pred_region
      _
    $region13: #{tpu_custom_call.1} parent=1 // pred_fallthru
      _
    // Predicated region
    $region14: #{tpu_custom_call.1} parent=1 // pred_check
      _
    $region15: #{tpu_custom_call.1} parent=1 // pred_check_branch
      %18 = sbr.rel (0) target = $region17
    $region16: #{tpu_custom_call.1} parent=1 // pred_region
      _
    $region17: #{tpu_custom_call.1} parent=1 // pred_fallthru
      _
    // Predicated region
    $region18: #{tpu_custom_call.1} parent=1 // pred_check
      _
    $region19: #{tpu_custom_call.1} parent=1 // pred_check_branch
      %20 = sbr.rel (0) target = $region21
    $region20: #{tpu_custom_call.1} parent=1 // pred_region
      _
    $region21: #{tpu_custom_call.1} parent=1 // pred_fallthru
      _
    %v21 = vld [vmem:[%s0] sm:$0xff]
    %v22 = vld [vmem:[%s0 + $0x8] sm:$0xff]
    %v23 = vld [vmem:[%s0 + $0x10] sm:$0xff]
    %v24 = vld [vmem:[%s0 + $0x18] sm:$0xff]
    %v25 = vld [vmem:[%s1] sm:$0xff]
    %v26 = vld [vmem:[%s1 + $0x8] sm:$0xff]
    %v27 = vld [vmem:[%s1 + $0x10] sm:$0xff]
    %v28 = vld [vmem:[%s1 + $0x18] sm:$0xff]
    %v29 = vmul.f32 %v21, %v21
    %v30 = vmul.f32 %v22, %v22
    %v31 = vmul.f32 %v23, %v23
    %v32 = vmul.f32 %v24, %v24
    %vm33 = vcmask 64512
    %v34 = vsel %vm33, %v29, 0.0
    %35 = vadd.xlane.f32.xlu0 %v34
    %v36 = vpop.xlane.xlu0 %35
    %v37 = vsel %vm33, %v30, 0.0
    %38 = vadd.xlane.f32.xlu0 %v37
    %v39 = vpop.xlane.xlu0 %38
    %v40 = vsel %vm33, %v31, 0.0
    %41 = vadd.xlane.f32.xlu0 %v40
    %v42 = vpop.xlane.xlu0 %41
    %v43 = vsel %vm33, %v32, 0.0
    %44 = vadd.xlane.f32.xlu0 %v43
    %v45 = vpop.xlane.xlu0 %44
    %v46 = vrsqrt.pop %v36
    %v47 = vrsqrt.pop %v39
    %v48 = vrsqrt.pop %v42
    %v49 = vrsqrt.pop %v45
    %v50 = vmul.f32 %v21, %v46
    %v51 = vmul.f32 %v22, %v47
    %v52 = vmul.f32 %v23, %v48
    %v53 = vmul.f32 %v24, %v49
    %v55 = vsel %vm33, %v50, 0
    %v58 = vsel %vm33, %v51, 0
    %60 = vmatprep.subr.mxu0 0.0
    %61 = vmatpush1.xpose.msra.mxu0 0.0
    %62 = vmatprep.subr.mxu0 0.0
    %63 = vmatpush1.xpose.msra.mxu0 0.0
    %64 = vmatprep.subr.mxu0 0.0
    %65 = vmatpush1.xpose.msra.mxu0 0.0
    %66 = vmatprep.subr.mxu0 0.0
    %67 = vmatpush1.xpose.msra.mxu0 0.0
    %68 = vmatprep.subr.mxu0 0.0
    %69 = vmatpush1.xpose.msra.mxu0 0.0
    %70 = vmatprep.subr.mxu0 0.0
    %71 = vmatpush1.xpose.msra.mxu0 0.0
    %72 = vmatprep.subr.mxu0 0.0
    %73 = vmatpush1.xpose.msra.mxu0 0.0
    %74 = vmatprep.subr.mxu0 0.0
    %75 = vmatpush1.xpose.msra.mxu0 0.0
    %76 = vmatprep.subr.mxu0 0.0
    %77 = vmatpush1.xpose.msra.mxu0 0.0
    %78 = vmatprep.subr.mxu0 0.0
    %79 = vmatpush1.xpose.msra.mxu0 0.0
    %80 = vmatprep.subr.mxu0 0.0
    %81 = vmatpush1.xpose.msra.mxu0 0.0
    %82 = vmatprep.subr.mxu0 0.0
    %83 = vmatpush1.xpose.msra.mxu0 0.0
    %84 = vmatprep.subr.mxu0 0.0
    %85 = vmatpush1.xpose.msra.mxu0 0.0
    %86 = vmatprep.subr.mxu0 0.0
    %87 = vmatpush1.xpose.msra.mxu0 0.0
    %88 = vmatprep.subr.mxu0 0.0
    %89 = vmatpush1.xpose.msra.mxu0 %v58
    %90 = vmatprep.subr.mxu0 0.0
    %91 = vmatpush1.xpose.msra.mxu0 %v55
    %92 = vmatprep.subr.mxu0 0.0
    %93 = vmatpush2.xpose.msra.mxu0 0.0
    %94 = vmatprep.subr.mxu0 0.0
    %95 = vmatpush2.xpose.msra.mxu0 0.0
    %96 = vmatprep.subr.mxu0 0.0
    %97 = vmatpush2.xpose.msra.mxu0 0.0
    %98 = vmatprep.subr.mxu0 0.0
    %99 = vmatpush2.xpose.msra.mxu0 0.0
    %100 = vmatprep.subr.mxu0 0.0
    %101 = vmatpush2.xpose.msra.mxu0 0.0
    %102 = vmatprep.subr.mxu0 0.0
    %103 = vmatpush2.xpose.msra.mxu0 0.0
    %104 = vmatprep.subr.mxu0 0.0
    %105 = vmatpush2.xpose.msra.mxu0 0.0
    %106 = vmatprep.subr.mxu0 0.0
    %107 = vmatpush2.xpose.msra.mxu0 0.0
    %108 = vmatprep.subr.mxu0 0.0
    %109 = vmatpush2.xpose.msra.mxu0 0.0
    %110 = vmatprep.subr.mxu0 0.0
    %111 = vmatpush2.xpose.msra.mxu0 0.0
    %112 = vmatprep.subr.mxu0 0.0
    %113 = vmatpush2.xpose.msra.mxu0 0.0
    %114 = vmatprep.subr.mxu0 0.0
    %115 = vmatpush2.xpose.msra.mxu0 0.0
    %116 = vmatprep.subr.mxu0 0.0
    %117 = vmatpush2.xpose.msra.mxu0 0.0
    %118 = vmatprep.subr.mxu0 0.0
    %119 = vmatpush2.xpose.msra.mxu0 0.0
    %120 = vmatprep.subr.mxu0 0.0
    %121 = vmatpush2.xpose.msra.mxu0 0.0
    %122 = vmatprep.subr.mxu0 0.0
    %123 = vmatpush2.xpose.msra.mxu0 0.0
    %124 = vmatprep.mubr.f32.mxu0 0.0
    %125 = vmatmul.mubr.f32.gmra.mxu0 %v55
    %v126 = vpop.f32.mrf.mxu0
    %v127 = vadd.f32 0.0, %v126
    %v128 = vpop.f32.mrf.mxu0
    %129 = vmatprep.mubr.f32.mxu0 0.0
    %130 = vmatmul.mubr.f32.gmra.mxu0 %v58
    %v131 = vpop.f32.mrf.mxu0
    %v132 = vadd.f32 0.0, %v131
    %v133 = vpop.f32.mrf.mxu0
    %134 = vdwg.mxu0
    %v136 = vsel %vm33, %v52, 0
    %v139 = vsel %vm33, %v53, 0
    %141 = vmatprep.subr.mxu0 0.0
    %142 = vmatpush1.xpose.msra.mxu0 0.0
    %143 = vmatprep.subr.mxu0 0.0
    %144 = vmatpush1.xpose.msra.mxu0 0.0
    %145 = vmatprep.subr.mxu0 0.0
    %146 = vmatpush1.xpose.msra.mxu0 0.0
    %147 = vmatprep.subr.mxu0 0.0
    %148 = vmatpush1.xpose.msra.mxu0 0.0
    %149 = vmatprep.subr.mxu0 0.0
    %150 = vmatpush1.xpose.msra.mxu0 0.0
    %151 = vmatprep.subr.mxu0 0.0
    %152 = vmatpush1.xpose.msra.mxu0 0.0
    %153 = vmatprep.subr.mxu0 0.0
    %154 = vmatpush1.xpose.msra.mxu0 0.0
    %155 = vmatprep.subr.mxu0 0.0
    %156 = vmatpush1.xpose.msra.mxu0 0.0
    %157 = vmatprep.subr.mxu0 0.0
    %158 = vmatpush1.xpose.msra.mxu0 0.0
    %159 = vmatprep.subr.mxu0 0.0
    %160 = vmatpush1.xpose.msra.mxu0 0.0
    %161 = vmatprep.subr.mxu0 0.0
    %162 = vmatpush1.xpose.msra.mxu0 0.0
    %163 = vmatprep.subr.mxu0 0.0
    %164 = vmatpush1.xpose.msra.mxu0 0.0
    %165 = vmatprep.subr.mxu0 0.0
    %166 = vmatpush1.xpose.msra.mxu0 0.0
    %167 = vmatprep.subr.mxu0 0.0
    %168 = vmatpush1.xpose.msra.mxu0 0.0
    %169 = vmatprep.subr.mxu0 0.0
    %170 = vmatpush1.xpose.msra.mxu0 %v139
    %171 = vmatprep.subr.mxu0 0.0
    %172 = vmatpush1.xpose.msra.mxu0 %v136
    %173 = vmatprep.subr.mxu0 0.0
    %174 = vmatpush2.xpose.msra.mxu0 0.0
    %175 = vmatprep.subr.mxu0 0.0
    %176 = vmatpush2.xpose.msra.mxu0 0.0
    %177 = vmatprep.subr.mxu0 0.0
    %178 = vmatpush2.xpose.msra.mxu0 0.0
    %179 = vmatprep.subr.mxu0 0.0
    %180 = vmatpush2.xpose.msra.mxu0 0.0
    %181 = vmatprep.subr.mxu0 0.0
    %182 = vmatpush2.xpose.msra.mxu0 0.0
    %183 = vmatprep.subr.mxu0 0.0
    %184 = vmatpush2.xpose.msra.mxu0 0.0
    %185 = vmatprep.subr.mxu0 0.0
    %186 = vmatpush2.xpose.msra.mxu0 0.0
    %187 = vmatprep.subr.mxu0 0.0
    %188 = vmatpush2.xpose.msra.mxu0 0.0
    %189 = vmatprep.subr.mxu0 0.0
    %190 = vmatpush2.xpose.msra.mxu0 0.0
    %191 = vmatprep.subr.mxu0 0.0
    %192 = vmatpush2.xpose.msra.mxu0 0.0
    %193 = vmatprep.subr.mxu0 0.0
    %194 = vmatpush2.xpose.msra.mxu0 0.0
    %195 = vmatprep.subr.mxu0 0.0
    %196 = vmatpush2.xpose.msra.mxu0 0.0
    %197 = vmatprep.subr.mxu0 0.0
    %198 = vmatpush2.xpose.msra.mxu0 0.0
    %199 = vmatprep.subr.mxu0 0.0
    %200 = vmatpush2.xpose.msra.mxu0 0.0
    %201 = vmatprep.subr.mxu0 0.0
    %202 = vmatpush2.xpose.msra.mxu0 0.0
    %203 = vmatprep.subr.mxu0 0.0
    %204 = vmatpush2.xpose.msra.mxu0 0.0
    %205 = vmatprep.mubr.f32.mxu0 0.0
    %206 = vmatmul.mubr.f32.gmra.mxu0 %v136
    %v207 = vpop.f32.mrf.mxu0
    %v208 = vadd.f32 0.0, %v207
    %v209 = vpop.f32.mrf.mxu0
    %210 = vmatprep.mubr.f32.mxu0 0.0
    %211 = vmatmul.mubr.f32.gmra.mxu0 %v139
    %v212 = vpop.f32.mrf.mxu0
    %v213 = vadd.f32 0.0, %v212
    %v214 = vpop.f32.mrf.mxu0
    %215 = vdwg.mxu0
    %v216 = vld [vmem:[%s2] sm:$0xff]
    %v217 = vld [vmem:[%s2 + $0x8] sm:$0xff]
    %v218 = vmul.f32 %v127, %v216
    %v219 = vmul.f32 %v132, %v217
    %v220 = vmul.f32 %v208, %v216
    %v221 = vmul.f32 %v213, %v217
    %vm222 = vcmask 130048
    %v223 = vsel %vm222, %v218, -inf
    %224 = vmax.xlane.f32.xlu0 %v223
    %v225 = vpop.xlane.xlu0 %224
    %v226 = vsel %vm222, %v219, -inf
    %227 = vmax.xlane.f32.xlu0 %v226
    %v228 = vpop.xlane.xlu0 %227
    %v229 = vsel %vm222, %v220, -inf
    %230 = vmax.xlane.f32.xlu0 %v229
    %v231 = vpop.xlane.xlu0 %230
    %v232 = vsel %vm222, %v221, -inf
    %233 = vmax.xlane.f32.xlu0 %v232
    %v234 = vpop.xlane.xlu0 %233
    %v235 = vmax.f32 %v225, %v228
    %v236 = vrot.slane %v235, 4
    %v237 = vmax.f32 %v235, %v236
    %v238 = vrot.slane %v237, 2
    %v239 = vmax.f32 %v237, %v238
    %v240 = vrot.slane %v239, 1
    %v241 = vmax.f32 %v239, %v240
    %v242 = vmax.f32 %v231, %v234
    %v243 = vrot.slane %v242, 4
    %v244 = vmax.f32 %v242, %v243
    %v245 = vrot.slane %v244, 2
    %v246 = vmax.f32 %v244, %v245
    %v247 = vrot.slane %v246, 1
    %v248 = vmax.f32 %v246, %v247
    %v249 = vsel %vm222, %v218, inf
    %250 = vmin.xlane.f32.xlu0 %v249
    %v251 = vpop.xlane.xlu0 %250
    %v252 = vsel %vm222, %v219, inf
    %253 = vmin.xlane.f32.xlu0 %v252
    %v254 = vpop.xlane.xlu0 %253
    %v255 = vsel %vm222, %v220, inf
    %256 = vmin.xlane.f32.xlu0 %v255
    %v257 = vpop.xlane.xlu0 %256
    %v258 = vsel %vm222, %v221, inf
    %259 = vmin.xlane.f32.xlu0 %v258
    %v260 = vpop.xlane.xlu0 %259
    %v261 = vmin.f32 %v251, %v254
    %v262 = vrot.slane %v261, 4
    %v263 = vmin.f32 %v261, %v262
    %v264 = vrot.slane %v263, 2
    %v265 = vmin.f32 %v263, %v264
    %v266 = vrot.slane %v265, 1
    %v267 = vmin.f32 %v265, %v266
    %v268 = vmin.f32 %v257, %v260
    %v269 = vrot.slane %v268, 4
    %v270 = vmin.f32 %v268, %v269
    %v271 = vrot.slane %v270, 2
    %v272 = vmin.f32 %v270, %v271
    %v273 = vrot.slane %v272, 1
    %v274 = vmin.f32 %v272, %v273
    %v275 = vsub.f32 %v218, %v267
    %v276 = vsub.f32 %v219, %v267
    %v277 = vsub.f32 %v220, %v274
    %v278 = vsub.f32 %v221, %v274
    %v279 = vsub.f32 %v241, %v267
    %v280 = vsub.f32 %v248, %v274
    %v281 = vrcp.pop %v279
    %v282 = vmul.f32 1.0, %v281
    %v283 = vrcp.pop %v280
    %v284 = vmul.f32 1.0, %v283
    %v285 = vmul.f32 %v275, %v282
    %v286 = vmul.f32 %v276, %v282
    %v287 = vmul.f32 %v277, %v284
    %v288 = vmul.f32 %v278, %v284
    %v289 = vsel %vm222, %v285, 0.0
    %290 = vadd.xlane.f32.xlu0 %v289
    %v291 = vpop.xlane.xlu0 %290
    %v292 = vsel %vm222, %v286, 0.0
    %293 = vadd.xlane.f32.xlu0 %v292
    %v294 = vpop.xlane.xlu0 %293
    %v295 = vsel %vm222, %v287, 0.0
    %296 = vadd.xlane.f32.xlu0 %v295
    %v297 = vpop.xlane.xlu0 %296
    %v298 = vsel %vm222, %v288, 0.0
    %299 = vadd.xlane.f32.xlu0 %v298
    %v300 = vpop.xlane.xlu0 %299
    %v301 = vrsqrt.pop %v291
    %v302 = vrsqrt.pop %v294
    %v303 = vrsqrt.pop %v297
    %v304 = vrsqrt.pop %v300
    %v305 = vmax.f32 %v301, 1e-10
    %v306 = vmax.f32 %v302, 1e-10
    %v307 = vmax.f32 %v303, 1e-10
    %v308 = vmax.f32 %v304, 1e-10
    %v309 = vmul.f32 %v305, %v25
    %v310 = vmul.f32 %v306, %v26
    %v311 = vmul.f32 %v307, %v27
    %v312 = vmul.f32 %v308, %v28
    %v314 = vsel %vm222, %v285, 0
    %v317 = vsel %vm222, %v286, 0
    %319 = vmatprep.subr.mxu0 0.0
    %320 = vmatpush1.msra.mxu0 0.0
    %321 = vmatprep.subr.mxu0 0.0
    %322 = vmatpush1.msra.mxu0 0.0
    %323 = vmatprep.subr.mxu0 0.0
    %324 = vmatpush1.msra.mxu0 0.0
    %325 = vmatprep.subr.mxu0 0.0
    %326 = vmatpush1.msra.mxu0 0.0
    %327 = vmatprep.subr.mxu0 0.0
    %328 = vmatpush1.msra.mxu0 0.0
    %329 = vmatprep.subr.mxu0 0.0
    %330 = vmatpush1.msra.mxu0 0.0
    %331 = vmatprep.subr.mxu0 0.0
    %332 = vmatpush1.msra.mxu0 0.0
    %333 = vmatprep.subr.mxu0 0.0
    %334 = vmatpush1.msra.mxu0 0.0
    %335 = vmatprep.subr.mxu0 0.0
    %336 = vmatpush1.msra.mxu0 0.0
    %337 = vmatprep.subr.mxu0 0.0
    %338 = vmatpush1.msra.mxu0 0.0
    %339 = vmatprep.subr.mxu0 0.0
    %340 = vmatpush1.msra.mxu0 0.0
    %341 = vmatprep.subr.mxu0 0.0
    %342 = vmatpush1.msra.mxu0 0.0
    %343 = vmatprep.subr.mxu0 0.0
    %344 = vmatpush1.msra.mxu0 0.0
    %345 = vmatprep.subr.mxu0 0.0
    %346 = vmatpush1.msra.mxu0 0.0
    %347 = vmatprep.subr.mxu0 0.0
    %348 = vmatpush1.msra.mxu0 %v310
    %349 = vmatprep.subr.mxu0 0.0
    %350 = vmatpush1.msra.mxu0 %v309
    %351 = vmatprep.subr.mxu0 0.0
    %352 = vmatpush2.msra.mxu0 0.0
    %353 = vmatprep.subr.mxu0 0.0
    %354 = vmatpush2.msra.mxu0 0.0
    %355 = vmatprep.subr.mxu0 0.0
    %356 = vmatpush2.msra.mxu0 0.0
    %357 = vmatprep.subr.mxu0 0.0
    %358 = vmatpush2.msra.mxu0 0.0
    %359 = vmatprep.subr.mxu0 0.0
    %360 = vmatpush2.msra.mxu0 0.0
    %361 = vmatprep.subr.mxu0 0.0
    %362 = vmatpush2.msra.mxu0 0.0
    %363 = vmatprep.subr.mxu0 0.0
    %364 = vmatpush2.msra.mxu0 0.0
    %365 = vmatprep.subr.mxu0 0.0
    %366 = vmatpush2.msra.mxu0 0.0
    %367 = vmatprep.subr.mxu0 0.0
    %368 = vmatpush2.msra.mxu0 0.0
    %369 = vmatprep.subr.mxu0 0.0
    %370 = vmatpush2.msra.mxu0 0.0
    %371 = vmatprep.subr.mxu0 0.0
    %372 = vmatpush2.msra.mxu0 0.0
    %373 = vmatprep.subr.mxu0 0.0
    %374 = vmatpush2.msra.mxu0 0.0
    %375 = vmatprep.subr.mxu0 0.0
    %376 = vmatpush2.msra.mxu0 0.0
    %377 = vmatprep.subr.mxu0 0.0
    %378 = vmatpush2.msra.mxu0 0.0
    %379 = vmatprep.subr.mxu0 0.0
    %380 = vmatpush2.msra.mxu0 0.0
    %381 = vmatprep.subr.mxu0 0.0
    %382 = vmatpush2.msra.mxu0 0.0
    %383 = vmatprep.mubr.f32.mxu0 0.0
    %384 = vmatmul.mubr.f32.gmra.mxu0 %v314
    %v385 = vpop.f32.mrf.mxu0
    %v386 = vadd.f32 0.0, %v385
    %v387 = vpop.f32.mrf.mxu0
    %388 = vmatprep.mubr.f32.mxu0 0.0
    %389 = vmatmul.mubr.f32.gmra.mxu0 %v317
    %v390 = vpop.f32.mrf.mxu0
    %v391 = vadd.f32 0.0, %v390
    %v392 = vpop.f32.mrf.mxu0
    %393 = vdwg.mxu0
    %v395 = vsel %vm222, %v287, 0
    %v398 = vsel %vm222, %v288, 0
    %400 = vmatprep.subr.mxu0 0.0
    %401 = vmatpush1.msra.mxu0 0.0
    %402 = vmatprep.subr.mxu0 0.0
    %403 = vmatpush1.msra.mxu0 0.0
    %404 = vmatprep.subr.mxu0 0.0
    %405 = vmatpush1.msra.mxu0 0.0
    %406 = vmatprep.subr.mxu0 0.0
    %407 = vmatpush1.msra.mxu0 0.0
    %408 = vmatprep.subr.mxu0 0.0
    %409 = vmatpush1.msra.mxu0 0.0
    %410 = vmatprep.subr.mxu0 0.0
    %411 = vmatpush1.msra.mxu0 0.0
    %412 = vmatprep.subr.mxu0 0.0
    %413 = vmatpush1.msra.mxu0 0.0
    %414 = vmatprep.subr.mxu0 0.0
    %415 = vmatpush1.msra.mxu0 0.0
    %416 = vmatprep.subr.mxu0 0.0
    %417 = vmatpush1.msra.mxu0 0.0
    %418 = vmatprep.subr.mxu0 0.0
    %419 = vmatpush1.msra.mxu0 0.0
    %420 = vmatprep.subr.mxu0 0.0
    %421 = vmatpush1.msra.mxu0 0.0
    %422 = vmatprep.subr.mxu0 0.0
    %423 = vmatpush1.msra.mxu0 0.0
    %424 = vmatprep.subr.mxu0 0.0
    %425 = vmatpush1.msra.mxu0 0.0
    %426 = vmatprep.subr.mxu0 0.0
    %427 = vmatpush1.msra.mxu0 0.0
    %428 = vmatprep.subr.mxu0 0.0
    %429 = vmatpush1.msra.mxu0 %v312
    %430 = vmatprep.subr.mxu0 0.0
    %431 = vmatpush1.msra.mxu0 %v311
    %432 = vmatprep.subr.mxu0 0.0
    %433 = vmatpush2.msra.mxu0 0.0
    %434 = vmatprep.subr.mxu0 0.0
    %435 = vmatpush2.msra.mxu0 0.0
    %436 = vmatprep.subr.mxu0 0.0
    %437 = vmatpush2.msra.mxu0 0.0
    %438 = vmatprep.subr.mxu0 0.0
    %439 = vmatpush2.msra.mxu0 0.0
    %440 = vmatprep.subr.mxu0 0.0
    %441 = vmatpush2.msra.mxu0 0.0
    %442 = vmatprep.subr.mxu0 0.0
    %443 = vmatpush2.msra.mxu0 0.0
    %444 = vmatprep.subr.mxu0 0.0
    %445 = vmatpush2.msra.mxu0 0.0
    %446 = vmatprep.subr.mxu0 0.0
    %447 = vmatpush2.msra.mxu0 0.0
    %448 = vmatprep.subr.mxu0 0.0
    %449 = vmatpush2.msra.mxu0 0.0
    %450 = vmatprep.subr.mxu0 0.0
    %451 = vmatpush2.msra.mxu0 0.0
    %452 = vmatprep.subr.mxu0 0.0
    %453 = vmatpush2.msra.mxu0 0.0
    %454 = vmatprep.subr.mxu0 0.0
    %455 = vmatpush2.msra.mxu0 0.0
    %456 = vmatprep.subr.mxu0 0.0
    %457 = vmatpush2.msra.mxu0 0.0
    %458 = vmatprep.subr.mxu0 0.0
    %459 = vmatpush2.msra.mxu0 0.0
    %460 = vmatprep.subr.mxu0 0.0
    %461 = vmatpush2.msra.mxu0 0.0
    %462 = vmatprep.subr.mxu0 0.0
    %463 = vmatpush2.msra.mxu0 0.0
    %464 = vmatprep.mubr.f32.mxu0 0.0
    %465 = vmatmul.mubr.f32.gmra.mxu0 %v395
    %v466 = vpop.f32.mrf.mxu0
    %v467 = vadd.f32 0.0, %v466
    %v468 = vpop.f32.mrf.mxu0
    %469 = vmatprep.mubr.f32.mxu0 0.0
    %470 = vmatmul.mubr.f32.gmra.mxu0 %v398
    %v471 = vpop.f32.mrf.mxu0
    %v472 = vadd.f32 0.0, %v471
    %v473 = vpop.f32.mrf.mxu0
    %474 = vdwg.mxu0
    %v475 = vmul.f32 %v305, %v386
    %v476 = vmul.f32 %v306, %v391
    %v477 = vmul.f32 %v307, %v467
    %v478 = vmul.f32 %v308, %v472
    %v479 = vld [vmem:[%s3] sm:$0xff]
    %v480 = vld [vmem:[%s3 + $0x8] sm:$0xff]
    %v481 = vld [vmem:[%s3 + $0x10] sm:$0xff]
    %v482 = vld [vmem:[%s3 + $0x18] sm:$0xff]
    %v483 = vld [vmem:[%s3 + $0x20] sm:$0xff]
    %v484 = vld [vmem:[%s3 + $0x28] sm:$0xff]
    %v485 = vld [vmem:[%s3 + $0x30] sm:$0xff]
    %v486 = vld [vmem:[%s3 + $0x38] sm:$0xff]
    %v487 = vld [vmem:[%s4] sm:$0xff]
    %v489 = vsel %vm33, %v475, 0
    %v492 = vsel %vm33, %v476, 0
    %v495 = vsel %vm33, %v477, 0
    %v498 = vsel %vm33, %v478, 0
    %500 = vmatprep.subr.mxu0 0.0
    %501 = vmatpush1.msra.mxu0 0.0
    %502 = vmatprep.subr.mxu0 0.0
    %503 = vmatpush1.msra.mxu0 0.0
    %504 = vmatprep.subr.mxu0 0.0
    %505 = vmatpush1.msra.mxu0 0.0
    %506 = vmatprep.subr.mxu0 0.0
    %507 = vmatpush1.msra.mxu0 0.0
    %508 = vmatprep.subr.mxu0 0.0
    %509 = vmatpush1.msra.mxu0 0.0
    %510 = vmatprep.subr.mxu0 0.0
    %511 = vmatpush1.msra.mxu0 0.0
    %512 = vmatprep.subr.mxu0 0.0
    %513 = vmatpush1.msra.mxu0 0.0
    %514 = vmatprep.subr.mxu0 0.0
    %515 = vmatpush1.msra.mxu0 0.0
    %516 = vmatprep.subr.mxu0 0.0
    %517 = vmatpush1.msra.mxu0 0.0
    %518 = vmatprep.subr.mxu0 0.0
    %519 = vmatpush1.msra.mxu0 0.0
    %520 = vmatprep.subr.mxu0 0.0
    %521 = vmatpush1.msra.mxu0 0.0
    %522 = vmatprep.subr.mxu0 0.0
    %523 = vmatpush1.msra.mxu0 0.0
    %524 = vmatprep.subr.mxu0 0.0
    %525 = vmatpush1.msra.mxu0 0.0
    %526 = vmatprep.subr.mxu0 0.0
    %527 = vmatpush1.msra.mxu0 0.0
    %528 = vmatprep.subr.mxu0 0.0
    %529 = vmatpush1.msra.mxu0 0.0
    %530 = vmatprep.subr.mxu0 0.0
    %531 = vmatpush1.msra.mxu0 %v479
    %532 = vmatprep.subr.mxu0 0.0
    %533 = vmatpush2.msra.mxu0 0.0
    %534 = vmatprep.subr.mxu0 0.0
    %535 = vmatpush2.msra.mxu0 0.0
    %536 = vmatprep.subr.mxu0 0.0
    %537 = vmatpush2.msra.mxu0 0.0
    %538 = vmatprep.subr.mxu0 0.0
    %539 = vmatpush2.msra.mxu0 0.0
    %540 = vmatprep.subr.mxu0 0.0
    %541 = vmatpush2.msra.mxu0 0.0
    %542 = vmatprep.subr.mxu0 0.0
    %543 = vmatpush2.msra.mxu0 0.0
    %544 = vmatprep.subr.mxu0 0.0
    %545 = vmatpush2.msra.mxu0 0.0
    %546 = vmatprep.subr.mxu0 0.0
    %547 = vmatpush2.msra.mxu0 0.0
    %548 = vmatprep.subr.mxu0 0.0
    %549 = vmatpush2.msra.mxu0 0.0
    %550 = vmatprep.subr.mxu0 0.0
    %551 = vmatpush2.msra.mxu0 0.0
    %552 = vmatprep.subr.mxu0 0.0
    %553 = vmatpush2.msra.mxu0 0.0
    %554 = vmatprep.subr.mxu0 0.0
    %555 = vmatpush2.msra.mxu0 0.0
    %556 = vmatprep.subr.mxu0 0.0
    %557 = vmatpush2.msra.mxu0 0.0
    %558 = vmatprep.subr.mxu0 0.0
    %559 = vmatpush2.msra.mxu0 0.0
    %560 = vmatprep.subr.mxu0 0.0
    %561 = vmatpush2.msra.mxu0 0.0
    %562 = vmatprep.subr.mxu0 0.0
    %563 = vmatpush2.msra.mxu0 0.0
    %564 = vmatprep.mubr.f32.mxu0 0.0
    %565 = vmatmul.mubr.f32.gmra.mxu0 %v489
    %v566 = vpop.f32.mrf.mxu0
    %v567 = vadd.f32 0.0, %v566
    %v568 = vpop.f32.mrf.mxu0
    %569 = vmatprep.mubr.f32.mxu0 0.0
    %570 = vmatmul.mubr.f32.gmra.mxu0 %v492
    %v571 = vpop.f32.mrf.mxu0
    %v572 = vadd.f32 0.0, %v571
    %v573 = vpop.f32.mrf.mxu0
    %574 = vmatprep.mubr.f32.mxu0 0.0
    %575 = vmatmul.mubr.f32.gmra.mxu0 %v495
    %v576 = vpop.f32.mrf.mxu0
    %v577 = vadd.f32 0.0, %v576
    %v578 = vpop.f32.mrf.mxu0
    %579 = vmatprep.mubr.f32.mxu0 0.0
    %580 = vmatmul.mubr.f32.gmra.mxu0 %v498
    %v581 = vpop.f32.mrf.mxu0
    %v582 = vadd.f32 0.0, %v581
    %v583 = vpop.f32.mrf.mxu0
    %584 = vdwg.mxu0
    %586 = vset.pattern.permute.xlu0 0
    %587 = vperm.xlu0 %586, %v25
    %v588 = vpop.permute.xlu0 %587
    %591 = vset.pattern.permute.xlu0 0
    %592 = vperm.xlu0 %591, %v26
    %v593 = vpop.permute.xlu0 %592
    %596 = vset.pattern.permute.xlu0 0
    %597 = vperm.xlu0 %596, %v27
    %v598 = vpop.permute.xlu0 %597
    %601 = vset.pattern.permute.xlu0 0
    %602 = vperm.xlu0 %601, %v28
    %v603 = vpop.permute.xlu0 %602
    %v605 = vmul.f32 %v588, %v567
    %v606 = vmul.f32 %v593, %v572
    %v607 = vmul.f32 %v598, %v577
    %v608 = vmul.f32 %v603, %v582
    %v609 = vsel %vm33, %v25, 0
    %v611 = vsel %vm33, %v26, 0
    %v613 = vsel %vm33, %v27, 0
    %v615 = vsel %vm33, %v28, 0
    %617 = vmatprep.subr.mxu0 0.0
    %618 = vmatpush1.msra.mxu0 0.0
    %619 = vmatprep.subr.mxu0 0.0
    %620 = vmatpush1.msra.mxu0 0.0
    %621 = vmatprep.subr.mxu0 0.0
    %622 = vmatpush1.msra.mxu0 0.0
    %623 = vmatprep.subr.mxu0 0.0
    %624 = vmatpush1.msra.mxu0 0.0
    %625 = vmatprep.subr.mxu0 0.0
    %626 = vmatpush1.msra.mxu0 0.0
    %627 = vmatprep.subr.mxu0 0.0
    %628 = vmatpush1.msra.mxu0 0.0
    %629 = vmatprep.subr.mxu0 0.0
    %630 = vmatpush1.msra.mxu0 0.0
    %631 = vmatprep.subr.mxu0 0.0
    %632 = vmatpush1.msra.mxu0 0.0
    %633 = vmatprep.subr.mxu0 0.0
    %634 = vmatpush1.msra.mxu0 0.0
    %635 = vmatprep.subr.mxu0 0.0
    %636 = vmatpush1.msra.mxu0 0.0
    %637 = vmatprep.subr.mxu0 0.0
    %638 = vmatpush1.msra.mxu0 0.0
    %639 = vmatprep.subr.mxu0 0.0
    %640 = vmatpush1.msra.mxu0 0.0
    %641 = vmatprep.subr.mxu0 0.0
    %642 = vmatpush1.msra.mxu0 0.0
    %643 = vmatprep.subr.mxu0 0.0
    %644 = vmatpush1.msra.mxu0 0.0
    %645 = vmatprep.subr.mxu0 0.0
    %646 = vmatpush1.msra.mxu0 0.0
    %647 = vmatprep.subr.mxu0 0.0
    %648 = vmatpush1.msra.mxu0 %v487
    %649 = vmatprep.subr.mxu0 0.0
    %650 = vmatpush2.msra.mxu0 0.0
    %651 = vmatprep.subr.mxu0 0.0
    %652 = vmatpush2.msra.mxu0 0.0
    %653 = vmatprep.subr.mxu0 0.0
    %654 = vmatpush2.msra.mxu0 0.0
    %655 = vmatprep.subr.mxu0 0.0
    %656 = vmatpush2.msra.mxu0 0.0
    %657 = vmatprep.subr.mxu0 0.0
    %658 = vmatpush2.msra.mxu0 0.0
    %659 = vmatprep.subr.mxu0 0.0
    %660 = vmatpush2.msra.mxu0 0.0
    %661 = vmatprep.subr.mxu0 0.0
    %662 = vmatpush2.msra.mxu0 0.0
    %663 = vmatprep.subr.mxu0 0.0
    %664 = vmatpush2.msra.mxu0 0.0
    %665 = vmatprep.subr.mxu0 0.0
    %666 = vmatpush2.msra.mxu0 0.0
    %667 = vmatprep.subr.mxu0 0.0
    %668 = vmatpush2.msra.mxu0 0.0
    %669 = vmatprep.subr.mxu0 0.0
    %670 = vmatpush2.msra.mxu0 0.0
    %671 = vmatprep.subr.mxu0 0.0
    %672 = vmatpush2.msra.mxu0 0.0
    %673 = vmatprep.subr.mxu0 0.0
    %674 = vmatpush2.msra.mxu0 0.0
    %675 = vmatprep.subr.mxu0 0.0
    %676 = vmatpush2.msra.mxu0 0.0
    %677 = vmatprep.subr.mxu0 0.0
    %678 = vmatpush2.msra.mxu0 0.0
    %679 = vmatprep.subr.mxu0 0.0
    %680 = vmatpush2.msra.mxu0 0.0
    %681 = vmatprep.mubr.f32.mxu0 0.0
    %682 = vmatmul.mubr.f32.gmra.mxu0 %v609
    %v683 = vpop.f32.mrf.mxu0
    %v684 = vadd.f32 %v605, %v683
    %v685 = vpop.f32.mrf.mxu0
    %686 = vmatprep.mubr.f32.mxu0 0.0
    %687 = vmatmul.mubr.f32.gmra.mxu0 %v611
    %v688 = vpop.f32.mrf.mxu0
    %v689 = vadd.f32 %v606, %v688
    %v690 = vpop.f32.mrf.mxu0
    %691 = vmatprep.mubr.f32.mxu0 0.0
    %692 = vmatmul.mubr.f32.gmra.mxu0 %v613
    %v693 = vpop.f32.mrf.mxu0
    %v694 = vadd.f32 %v607, %v693
    %v695 = vpop.f32.mrf.mxu0
    %696 = vmatprep.mubr.f32.mxu0 0.0
    %697 = vmatmul.mubr.f32.gmra.mxu0 %v615
    %v698 = vpop.f32.mrf.mxu0
    %v699 = vadd.f32 %v608, %v698
    %v700 = vpop.f32.mrf.mxu0
    %701 = vdwg.mxu0
    %702 = vmatprep.subr.mxu0 0.0
    %703 = vmatpush1.msra.mxu0 0.0
    %704 = vmatprep.subr.mxu0 0.0
    %705 = vmatpush1.msra.mxu0 0.0
    %706 = vmatprep.subr.mxu0 0.0
    %707 = vmatpush1.msra.mxu0 0.0
    %708 = vmatprep.subr.mxu0 0.0
    %709 = vmatpush1.msra.mxu0 0.0
    %710 = vmatprep.subr.mxu0 0.0
    %711 = vmatpush1.msra.mxu0 0.0
    %712 = vmatprep.subr.mxu0 0.0
    %713 = vmatpush1.msra.mxu0 0.0
    %714 = vmatprep.subr.mxu0 0.0
    %715 = vmatpush1.msra.mxu0 0.0
    %716 = vmatprep.subr.mxu0 0.0
    %717 = vmatpush1.msra.mxu0 0.0
    %718 = vmatprep.subr.mxu0 0.0
    %719 = vmatpush1.msra.mxu0 0.0
    %720 = vmatprep.subr.mxu0 0.0
    %721 = vmatpush1.msra.mxu0 0.0
    %722 = vmatprep.subr.mxu0 0.0
    %723 = vmatpush1.msra.mxu0 0.0
    %724 = vmatprep.subr.mxu0 0.0
    %725 = vmatpush1.msra.mxu0 0.0
    %726 = vmatprep.subr.mxu0 0.0
    %727 = vmatpush1.msra.mxu0 0.0
    %728 = vmatprep.subr.mxu0 0.0
    %729 = vmatpush1.msra.mxu0 0.0
    %730 = vmatprep.subr.mxu0 0.0
    %731 = vmatpush1.msra.mxu0 0.0
    %732 = vmatprep.subr.mxu0 0.0
    %733 = vmatpush1.msra.mxu0 %v480
    %734 = vmatprep.subr.mxu0 0.0
    %735 = vmatpush2.msra.mxu0 0.0
    %736 = vmatprep.subr.mxu0 0.0
    %737 = vmatpush2.msra.mxu0 0.0
    %738 = vmatprep.subr.mxu0 0.0
    %739 = vmatpush2.msra.mxu0 0.0
    %740 = vmatprep.subr.mxu0 0.0
    %741 = vmatpush2.msra.mxu0 0.0
    %742 = vmatprep.subr.mxu0 0.0
    %743 = vmatpush2.msra.mxu0 0.0
    %744 = vmatprep.subr.mxu0 0.0
    %745 = vmatpush2.msra.mxu0 0.0
    %746 = vmatprep.subr.mxu0 0.0
    %747 = vmatpush2.msra.mxu0 0.0
    %748 = vmatprep.subr.mxu0 0.0
    %749 = vmatpush2.msra.mxu0 0.0
    %750 = vmatprep.subr.mxu0 0.0
    %751 = vmatpush2.msra.mxu0 0.0
    %752 = vmatprep.subr.mxu0 0.0
    %753 = vmatpush2.msra.mxu0 0.0
    %754 = vmatprep.subr.mxu0 0.0
    %755 = vmatpush2.msra.mxu0 0.0
    %756 = vmatprep.subr.mxu0 0.0
    %757 = vmatpush2.msra.mxu0 0.0
    %758 = vmatprep.subr.mxu0 0.0
    %759 = vmatpush2.msra.mxu0 0.0
    %760 = vmatprep.subr.mxu0 0.0
    %761 = vmatpush2.msra.mxu0 0.0
    %762 = vmatprep.subr.mxu0 0.0
    %763 = vmatpush2.msra.mxu0 0.0
    %764 = vmatprep.subr.mxu0 0.0
    %765 = vmatpush2.msra.mxu0 0.0
    %766 = vmatprep.mubr.f32.mxu0 0.0
    %767 = vmatmul.mubr.f32.gmra.mxu0 %v489
    %v768 = vpop.f32.mrf.mxu0
    %v769 = vadd.f32 0.0, %v768
    %v770 = vpop.f32.mrf.mxu0
    %771 = vmatprep.mubr.f32.mxu0 0.0
    %772 = vmatmul.mubr.f32.gmra.mxu0 %v492
    %v773 = vpop.f32.mrf.mxu0
    %v774 = vadd.f32 0.0, %v773
    %v775 = vpop.f32.mrf.mxu0
    %776 = vmatprep.mubr.f32.mxu0 0.0
    %777 = vmatmul.mubr.f32.gmra.mxu0 %v495
    %v778 = vpop.f32.mrf.mxu0
    %v779 = vadd.f32 0.0, %v778
    %v780 = vpop.f32.mrf.mxu0
    %781 = vmatprep.mubr.f32.mxu0 0.0
    %782 = vmatmul.mubr.f32.gmra.mxu0 %v498
    %v783 = vpop.f32.mrf.mxu0
    %v784 = vadd.f32 0.0, %v783
    %v785 = vpop.f32.mrf.mxu0
    %786 = vdwg.mxu0
    %787 = vset.pattern.permute.xlu0 1
    %788 = vperm.xlu0 %787, %v25
    %v789 = vpop.permute.xlu0 %788
    %791 = vset.pattern.permute.xlu0 1
    %792 = vperm.xlu0 %791, %v26
    %v793 = vpop.permute.xlu0 %792
    %795 = vset.pattern.permute.xlu0 1
    %796 = vperm.xlu0 %795, %v27
    %v797 = vpop.permute.xlu0 %796
    %799 = vset.pattern.permute.xlu0 1
    %800 = vperm.xlu0 %799, %v28
    %v801 = vpop.permute.xlu0 %800
    %v803 = vmul.f32 %v789, %v769
    %v804 = vmul.f32 %v793, %v774
    %v805 = vmul.f32 %v797, %v779
    %v806 = vmul.f32 %v801, %v784
    %v807 = vadd.f32 %v684, %v803
    %v808 = vadd.f32 %v689, %v804
    %v809 = vadd.f32 %v694, %v805
    %v810 = vadd.f32 %v699, %v806
    %811 = vmatprep.subr.mxu0 0.0
    %812 = vmatpush1.msra.mxu0 0.0
    %813 = vmatprep.subr.mxu0 0.0
    %814 = vmatpush1.msra.mxu0 0.0
    %815 = vmatprep.subr.mxu0 0.0
    %816 = vmatpush1.msra.mxu0 0.0
    %817 = vmatprep.subr.mxu0 0.0
    %818 = vmatpush1.msra.mxu0 0.0
    %819 = vmatprep.subr.mxu0 0.0
    %820 = vmatpush1.msra.mxu0 0.0
    %821 = vmatprep.subr.mxu0 0.0
    %822 = vmatpush1.msra.mxu0 0.0
    %823 = vmatprep.subr.mxu0 0.0
    %824 = vmatpush1.msra.mxu0 0.0
    %825 = vmatprep.subr.mxu0 0.0
    %826 = vmatpush1.msra.mxu0 0.0
    %827 = vmatprep.subr.mxu0 0.0
    %828 = vmatpush1.msra.mxu0 0.0
    %829 = vmatprep.subr.mxu0 0.0
    %830 = vmatpush1.msra.mxu0 0.0
    %831 = vmatprep.subr.mxu0 0.0
    %832 = vmatpush1.msra.mxu0 0.0
    %833 = vmatprep.subr.mxu0 0.0
    %834 = vmatpush1.msra.mxu0 0.0
    %835 = vmatprep.subr.mxu0 0.0
    %836 = vmatpush1.msra.mxu0 0.0
    %837 = vmatprep.subr.mxu0 0.0
    %838 = vmatpush1.msra.mxu0 0.0
    %839 = vmatprep.subr.mxu0 0.0
    %840 = vmatpush1.msra.mxu0 0.0
    %841 = vmatprep.subr.mxu0 0.0
    %842 = vmatpush1.msra.mxu0 %v481
    %843 = vmatprep.subr.mxu0 0.0
    %844 = vmatpush2.msra.mxu0 0.0
    %845 = vmatprep.subr.mxu0 0.0
    %846 = vmatpush2.msra.mxu0 0.0
    %847 = vmatprep.subr.mxu0 0.0
    %848 = vmatpush2.msra.mxu0 0.0
    %849 = vmatprep.subr.mxu0 0.0
    %850 = vmatpush2.msra.mxu0 0.0
    %851 = vmatprep.subr.mxu0 0.0
    %852 = vmatpush2.msra.mxu0 0.0
    %853 = vmatprep.subr.mxu0 0.0
    %854 = vmatpush2.msra.mxu0 0.0
    %855 = vmatprep.subr.mxu0 0.0
    %856 = vmatpush2.msra.mxu0 0.0
    %857 = vmatprep.subr.mxu0 0.0
    %858 = vmatpush2.msra.mxu0 0.0
    %859 = vmatprep.subr.mxu0 0.0
    %860 = vmatpush2.msra.mxu0 0.0
    %861 = vmatprep.subr.mxu0 0.0
    %862 = vmatpush2.msra.mxu0 0.0
    %863 = vmatprep.subr.mxu0 0.0
    %864 = vmatpush2.msra.mxu0 0.0
    %865 = vmatprep.subr.mxu0 0.0
    %866 = vmatpush2.msra.mxu0 0.0
    %867 = vmatprep.subr.mxu0 0.0
    %868 = vmatpush2.msra.mxu0 0.0
    %869 = vmatprep.subr.mxu0 0.0
    %870 = vmatpush2.msra.mxu0 0.0
    %871 = vmatprep.subr.mxu0 0.0
    %872 = vmatpush2.msra.mxu0 0.0
    %873 = vmatprep.subr.mxu0 0.0
    %874 = vmatpush2.msra.mxu0 0.0
    %875 = vmatprep.mubr.f32.mxu0 0.0
    %876 = vmatmul.mubr.f32.gmra.mxu0 %v489
    %v877 = vpop.f32.mrf.mxu0
    %v878 = vadd.f32 0.0, %v877
    %v879 = vpop.f32.mrf.mxu0
    %880 = vmatprep.mubr.f32.mxu0 0.0
    %881 = vmatmul.mubr.f32.gmra.mxu0 %v492
    %v882 = vpop.f32.mrf.mxu0
    %v883 = vadd.f32 0.0, %v882
    %v884 = vpop.f32.mrf.mxu0
    %885 = vmatprep.mubr.f32.mxu0 0.0
    %886 = vmatmul.mubr.f32.gmra.mxu0 %v495
    %v887 = vpop.f32.mrf.mxu0
    %v888 = vadd.f32 0.0, %v887
    %v889 = vpop.f32.mrf.mxu0
    %890 = vmatprep.mubr.f32.mxu0 0.0
    %891 = vmatmul.mubr.f32.gmra.mxu0 %v498
    %v892 = vpop.f32.mrf.mxu0
    %v893 = vadd.f32 0.0, %v892
    %v894 = vpop.f32.mrf.mxu0
    %895 = vdwg.mxu0
    %896 = vset.pattern.permute.xlu0 2
    %897 = vperm.xlu0 %896, %v25
    %v898 = vpop.permute.xlu0 %897
    %900 = vset.pattern.permute.xlu0 2
    %901 = vperm.xlu0 %900, %v26
    %v902 = vpop.permute.xlu0 %901
    %904 = vset.pattern.permute.xlu0 2
    %905 = vperm.xlu0 %904, %v27
    %v906 = vpop.permute.xlu0 %905
    %908 = vset.pattern.permute.xlu0 2
    %909 = vperm.xlu0 %908, %v28
    %v910 = vpop.permute.xlu0 %909
    %v912 = vmul.f32 %v898, %v878
    %v913 = vmul.f32 %v902, %v883
    %v914 = vmul.f32 %v906, %v888
    %v915 = vmul.f32 %v910, %v893
    %v916 = vadd.f32 %v807, %v912
    %v917 = vadd.f32 %v808, %v913
    %v918 = vadd.f32 %v809, %v914
    %v919 = vadd.f32 %v810, %v915
    %920 = vmatprep.subr.mxu0 0.0
    %921 = vmatpush1.msra.mxu0 0.0
    %922 = vmatprep.subr.mxu0 0.0
    %923 = vmatpush1.msra.mxu0 0.0
    %924 = vmatprep.subr.mxu0 0.0
    %925 = vmatpush1.msra.mxu0 0.0
    %926 = vmatprep.subr.mxu0 0.0
    %927 = vmatpush1.msra.mxu0 0.0
    %928 = vmatprep.subr.mxu0 0.0
    %929 = vmatpush1.msra.mxu0 0.0
    %930 = vmatprep.subr.mxu0 0.0
    %931 = vmatpush1.msra.mxu0 0.0
    %932 = vmatprep.subr.mxu0 0.0
    %933 = vmatpush1.msra.mxu0 0.0
    %934 = vmatprep.subr.mxu0 0.0
    %935 = vmatpush1.msra.mxu0 0.0
    %936 = vmatprep.subr.mxu0 0.0
    %937 = vmatpush1.msra.mxu0 0.0
    %938 = vmatprep.subr.mxu0 0.0
    %939 = vmatpush1.msra.mxu0 0.0
    %940 = vmatprep.subr.mxu0 0.0
    %941 = vmatpush1.msra.mxu0 0.0
    %942 = vmatprep.subr.mxu0 0.0
    %943 = vmatpush1.msra.mxu0 0.0
    %944 = vmatprep.subr.mxu0 0.0
    %945 = vmatpush1.msra.mxu0 0.0
    %946 = vmatprep.subr.mxu0 0.0
    %947 = vmatpush1.msra.mxu0 0.0
    %948 = vmatprep.subr.mxu0 0.0
    %949 = vmatpush1.msra.mxu0 0.0
    %950 = vmatprep.subr.mxu0 0.0
    %951 = vmatpush1.msra.mxu0 %v482
    %952 = vmatprep.subr.mxu0 0.0
    %953 = vmatpush2.msra.mxu0 0.0
    %954 = vmatprep.subr.mxu0 0.0
    %955 = vmatpush2.msra.mxu0 0.0
    %956 = vmatprep.subr.mxu0 0.0
    %957 = vmatpush2.msra.mxu0 0.0
    %958 = vmatprep.subr.mxu0 0.0
    %959 = vmatpush2.msra.mxu0 0.0
    %960 = vmatprep.subr.mxu0 0.0
    %961 = vmatpush2.msra.mxu0 0.0
    %962 = vmatprep.subr.mxu0 0.0
    %963 = vmatpush2.msra.mxu0 0.0
    %964 = vmatprep.subr.mxu0 0.0
    %965 = vmatpush2.msra.mxu0 0.0
    %966 = vmatprep.subr.mxu0 0.0
    %967 = vmatpush2.msra.mxu0 0.0
    %968 = vmatprep.subr.mxu0 0.0
    %969 = vmatpush2.msra.mxu0 0.0
    %970 = vmatprep.subr.mxu0 0.0
    %971 = vmatpush2.msra.mxu0 0.0
    %972 = vmatprep.subr.mxu0 0.0
    %973 = vmatpush2.msra.mxu0 0.0
    %974 = vmatprep.subr.mxu0 0.0
    %975 = vmatpush2.msra.mxu0 0.0
    %976 = vmatprep.subr.mxu0 0.0
    %977 = vmatpush2.msra.mxu0 0.0
    %978 = vmatprep.subr.mxu0 0.0
    %979 = vmatpush2.msra.mxu0 0.0
    %980 = vmatprep.subr.mxu0 0.0
    %981 = vmatpush2.msra.mxu0 0.0
    %982 = vmatprep.subr.mxu0 0.0
    %983 = vmatpush2.msra.mxu0 0.0
    %984 = vmatprep.mubr.f32.mxu0 0.0
    %985 = vmatmul.mubr.f32.gmra.mxu0 %v489
    %v986 = vpop.f32.mrf.mxu0
    %v987 = vadd.f32 0.0, %v986
    %v988 = vpop.f32.mrf.mxu0
    %989 = vmatprep.mubr.f32.mxu0 0.0
    %990 = vmatmul.mubr.f32.gmra.mxu0 %v492
    %v991 = vpop.f32.mrf.mxu0
    %v992 = vadd.f32 0.0, %v991
    %v993 = vpop.f32.mrf.mxu0
    %994 = vmatprep.mubr.f32.mxu0 0.0
    %995 = vmatmul.mubr.f32.gmra.mxu0 %v495
    %v996 = vpop.f32.mrf.mxu0
    %v997 = vadd.f32 0.0, %v996
    %v998 = vpop.f32.mrf.mxu0
    %999 = vmatprep.mubr.f32.mxu0 0.0
    %1000 = vmatmul.mubr.f32.gmra.mxu0 %v498
    %v1001 = vpop.f32.mrf.mxu0
    %v1002 = vadd.f32 0.0, %v1001
    %v1003 = vpop.f32.mrf.mxu0
    %1004 = vdwg.mxu0
    %1005 = vset.pattern.permute.xlu0 3
    %1006 = vperm.xlu0 %1005, %v25
    %v1007 = vpop.permute.xlu0 %1006
    %1009 = vset.pattern.permute.xlu0 3
    %1010 = vperm.xlu0 %1009, %v26
    %v1011 = vpop.permute.xlu0 %1010
    %1013 = vset.pattern.permute.xlu0 3
    %1014 = vperm.xlu0 %1013, %v27
    %v1015 = vpop.permute.xlu0 %1014
    %1017 = vset.pattern.permute.xlu0 3
    %1018 = vperm.xlu0 %1017, %v28
    %v1019 = vpop.permute.xlu0 %1018
    %v1021 = vmul.f32 %v1007, %v987
    %v1022 = vmul.f32 %v1011, %v992
    %v1023 = vmul.f32 %v1015, %v997
    %v1024 = vmul.f32 %v1019, %v1002
    %v1025 = vadd.f32 %v916, %v1021
    %v1026 = vadd.f32 %v917, %v1022
    %v1027 = vadd.f32 %v918, %v1023
    %v1028 = vadd.f32 %v919, %v1024
    %1029 = vmatprep.subr.mxu0 0.0
    %1030 = vmatpush1.msra.mxu0 0.0
    %1031 = vmatprep.subr.mxu0 0.0
    %1032 = vmatpush1.msra.mxu0 0.0
    %1033 = vmatprep.subr.mxu0 0.0
    %1034 = vmatpush1.msra.mxu0 0.0
    %1035 = vmatprep.subr.mxu0 0.0
    %1036 = vmatpush1.msra.mxu0 0.0
    %1037 = vmatprep.subr.mxu0 0.0
    %1038 = vmatpush1.msra.mxu0 0.0
    %1039 = vmatprep.subr.mxu0 0.0
    %1040 = vmatpush1.msra.mxu0 0.0
    %1041 = vmatprep.subr.mxu0 0.0
    %1042 = vmatpush1.msra.mxu0 0.0
    %1043 = vmatprep.subr.mxu0 0.0
    %1044 = vmatpush1.msra.mxu0 0.0
    %1045 = vmatprep.subr.mxu0 0.0
    %1046 = vmatpush1.msra.mxu0 0.0
    %1047 = vmatprep.subr.mxu0 0.0
    %1048 = vmatpush1.msra.mxu0 0.0
    %1049 = vmatprep.subr.mxu0 0.0
    %1050 = vmatpush1.msra.mxu0 0.0
    %1051 = vmatprep.subr.mxu0 0.0
    %1052 = vmatpush1.msra.mxu0 0.0
    %1053 = vmatprep.subr.mxu0 0.0
    %1054 = vmatpush1.msra.mxu0 0.0
    %1055 = vmatprep.subr.mxu0 0.0
    %1056 = vmatpush1.msra.mxu0 0.0
    %1057 = vmatprep.subr.mxu0 0.0
    %1058 = vmatpush1.msra.mxu0 0.0
    %1059 = vmatprep.subr.mxu0 0.0
    %1060 = vmatpush1.msra.mxu0 %v483
    %1061 = vmatprep.subr.mxu0 0.0
    %1062 = vmatpush2.msra.mxu0 0.0
    %1063 = vmatprep.subr.mxu0 0.0
    %1064 = vmatpush2.msra.mxu0 0.0
    %1065 = vmatprep.subr.mxu0 0.0
    %1066 = vmatpush2.msra.mxu0 0.0
    %1067 = vmatprep.subr.mxu0 0.0
    %1068 = vmatpush2.msra.mxu0 0.0
    %1069 = vmatprep.subr.mxu0 0.0
    %1070 = vmatpush2.msra.mxu0 0.0
    %1071 = vmatprep.subr.mxu0 0.0
    %1072 = vmatpush2.msra.mxu0 0.0
    %1073 = vmatprep.subr.mxu0 0.0
    %1074 = vmatpush2.msra.mxu0 0.0
    %1075 = vmatprep.subr.mxu0 0.0
    %1076 = vmatpush2.msra.mxu0 0.0
    %1077 = vmatprep.subr.mxu0 0.0
    %1078 = vmatpush2.msra.mxu0 0.0
    %1079 = vmatprep.subr.mxu0 0.0
    %1080 = vmatpush2.msra.mxu0 0.0
    %1081 = vmatprep.subr.mxu0 0.0
    %1082 = vmatpush2.msra.mxu0 0.0
    %1083 = vmatprep.subr.mxu0 0.0
    %1084 = vmatpush2.msra.mxu0 0.0
    %1085 = vmatprep.subr.mxu0 0.0
    %1086 = vmatpush2.msra.mxu0 0.0
    %1087 = vmatprep.subr.mxu0 0.0
    %1088 = vmatpush2.msra.mxu0 0.0
    %1089 = vmatprep.subr.mxu0 0.0
    %1090 = vmatpush2.msra.mxu0 0.0
    %1091 = vmatprep.subr.mxu0 0.0
    %1092 = vmatpush2.msra.mxu0 0.0
    %1093 = vmatprep.mubr.f32.mxu0 0.0
    %1094 = vmatmul.mubr.f32.gmra.mxu0 %v489
    %v1095 = vpop.f32.mrf.mxu0
    %v1096 = vadd.f32 0.0, %v1095
    %v1097 = vpop.f32.mrf.mxu0
    %1098 = vmatprep.mubr.f32.mxu0 0.0
    %1099 = vmatmul.mubr.f32.gmra.mxu0 %v492
    %v1100 = vpop.f32.mrf.mxu0
    %v1101 = vadd.f32 0.0, %v1100
    %v1102 = vpop.f32.mrf.mxu0
    %1103 = vmatprep.mubr.f32.mxu0 0.0
    %1104 = vmatmul.mubr.f32.gmra.mxu0 %v495
    %v1105 = vpop.f32.mrf.mxu0
    %v1106 = vadd.f32 0.0, %v1105
    %v1107 = vpop.f32.mrf.mxu0
    %1108 = vmatprep.mubr.f32.mxu0 0.0
    %1109 = vmatmul.mubr.f32.gmra.mxu0 %v498
    %v1110 = vpop.f32.mrf.mxu0
    %v1111 = vadd.f32 0.0, %v1110
    %v1112 = vpop.f32.mrf.mxu0
    %1113 = vdwg.mxu0
    %1114 = vset.pattern.permute.xlu0 4
    %1115 = vperm.xlu0 %1114, %v25
    %v1116 = vpop.permute.xlu0 %1115
    %1118 = vset.pattern.permute.xlu0 4
    %1119 = vperm.xlu0 %1118, %v26
    %v1120 = vpop.permute.xlu0 %1119
    %1122 = vset.pattern.permute.xlu0 4
    %1123 = vperm.xlu0 %1122, %v27
    %v1124 = vpop.permute.xlu0 %1123
    %1126 = vset.pattern.permute.xlu0 4
    %1127 = vperm.xlu0 %1126, %v28
    %v1128 = vpop.permute.xlu0 %1127
    %v1130 = vmul.f32 %v1116, %v1096
    %v1131 = vmul.f32 %v1120, %v1101
    %v1132 = vmul.f32 %v1124, %v1106
    %v1133 = vmul.f32 %v1128, %v1111
    %v1134 = vadd.f32 %v1025, %v1130
    %v1135 = vadd.f32 %v1026, %v1131
    %v1136 = vadd.f32 %v1027, %v1132
    %v1137 = vadd.f32 %v1028, %v1133
    %1138 = vmatprep.subr.mxu0 0.0
    %1139 = vmatpush1.msra.mxu0 0.0
    %1140 = vmatprep.subr.mxu0 0.0
    %1141 = vmatpush1.msra.mxu0 0.0
    %1142 = vmatprep.subr.mxu0 0.0
    %1143 = vmatpush1.msra.mxu0 0.0
    %1144 = vmatprep.subr.mxu0 0.0
    %1145 = vmatpush1.msra.mxu0 0.0
    %1146 = vmatprep.subr.mxu0 0.0
    %1147 = vmatpush1.msra.mxu0 0.0
    %1148 = vmatprep.subr.mxu0 0.0
    %1149 = vmatpush1.msra.mxu0 0.0
    %1150 = vmatprep.subr.mxu0 0.0
    %1151 = vmatpush1.msra.mxu0 0.0
    %1152 = vmatprep.subr.mxu0 0.0
    %1153 = vmatpush1.msra.mxu0 0.0
    %1154 = vmatprep.subr.mxu0 0.0
    %1155 = vmatpush1.msra.mxu0 0.0
    %1156 = vmatprep.subr.mxu0 0.0
    %1157 = vmatpush1.msra.mxu0 0.0
    %1158 = vmatprep.subr.mxu0 0.0
    %1159 = vmatpush1.msra.mxu0 0.0
    %1160 = vmatprep.subr.mxu0 0.0
    %1161 = vmatpush1.msra.mxu0 0.0
    %1162 = vmatprep.subr.mxu0 0.0
    %1163 = vmatpush1.msra.mxu0 0.0
    %1164 = vmatprep.subr.mxu0 0.0
    %1165 = vmatpush1.msra.mxu0 0.0
    %1166 = vmatprep.subr.mxu0 0.0
    %1167 = vmatpush1.msra.mxu0 0.0
    %1168 = vmatprep.subr.mxu0 0.0
    %1169 = vmatpush1.msra.mxu0 %v484
    %1170 = vmatprep.subr.mxu0 0.0
    %1171 = vmatpush2.msra.mxu0 0.0
    %1172 = vmatprep.subr.mxu0 0.0
    %1173 = vmatpush2.msra.mxu0 0.0
    %1174 = vmatprep.subr.mxu0 0.0
    %1175 = vmatpush2.msra.mxu0 0.0
    %1176 = vmatprep.subr.mxu0 0.0
    %1177 = vmatpush2.msra.mxu0 0.0
    %1178 = vmatprep.subr.mxu0 0.0
    %1179 = vmatpush2.msra.mxu0 0.0
    %1180 = vmatprep.subr.mxu0 0.0
    %1181 = vmatpush2.msra.mxu0 0.0
    %1182 = vmatprep.subr.mxu0 0.0
    %1183 = vmatpush2.msra.mxu0 0.0
    %1184 = vmatprep.subr.mxu0 0.0
    %1185 = vmatpush2.msra.mxu0 0.0
    %1186 = vmatprep.subr.mxu0 0.0
    %1187 = vmatpush2.msra.mxu0 0.0
    %1188 = vmatprep.subr.mxu0 0.0
    %1189 = vmatpush2.msra.mxu0 0.0
    %1190 = vmatprep.subr.mxu0 0.0
    %1191 = vmatpush2.msra.mxu0 0.0
    %1192 = vmatprep.subr.mxu0 0.0
    %1193 = vmatpush2.msra.mxu0 0.0
    %1194 = vmatprep.subr.mxu0 0.0
    %1195 = vmatpush2.msra.mxu0 0.0
    %1196 = vmatprep.subr.mxu0 0.0
    %1197 = vmatpush2.msra.mxu0 0.0
    %1198 = vmatprep.subr.mxu0 0.0
    %1199 = vmatpush2.msra.mxu0 0.0
    %1200 = vmatprep.subr.mxu0 0.0
    %1201 = vmatpush2.msra.mxu0 0.0
    %1202 = vmatprep.mubr.f32.mxu0 0.0
    %1203 = vmatmul.mubr.f32.gmra.mxu0 %v489
    %v1204 = vpop.f32.mrf.mxu0
    %v1205 = vadd.f32 0.0, %v1204
    %v1206 = vpop.f32.mrf.mxu0
    %1207 = vmatprep.mubr.f32.mxu0 0.0
    %1208 = vmatmul.mubr.f32.gmra.mxu0 %v492
    %v1209 = vpop.f32.mrf.mxu0
    %v1210 = vadd.f32 0.0, %v1209
    %v1211 = vpop.f32.mrf.mxu0
    %1212 = vmatprep.mubr.f32.mxu0 0.0
    %1213 = vmatmul.mubr.f32.gmra.mxu0 %v495
    %v1214 = vpop.f32.mrf.mxu0
    %v1215 = vadd.f32 0.0, %v1214
    %v1216 = vpop.f32.mrf.mxu0
    %1217 = vmatprep.mubr.f32.mxu0 0.0
    %1218 = vmatmul.mubr.f32.gmra.mxu0 %v498
    %v1219 = vpop.f32.mrf.mxu0
    %v1220 = vadd.f32 0.0, %v1219
    %v1221 = vpop.f32.mrf.mxu0
    %1222 = vdwg.mxu0
    %1223 = vset.pattern.permute.xlu0 5
    %1224 = vperm.xlu0 %1223, %v25
    %v1225 = vpop.permute.xlu0 %1224
    %1227 = vset.pattern.permute.xlu0 5
    %1228 = vperm.xlu0 %1227, %v26
    %v1229 = vpop.permute.xlu0 %1228
    %1231 = vset.pattern.permute.xlu0 5
    %1232 = vperm.xlu0 %1231, %v27
    %v1233 = vpop.permute.xlu0 %1232
    %1235 = vset.pattern.permute.xlu0 5
    %1236 = vperm.xlu0 %1235, %v28
    %v1237 = vpop.permute.xlu0 %1236
    %v1239 = vmul.f32 %v1225, %v1205
    %v1240 = vmul.f32 %v1229, %v1210
    %v1241 = vmul.f32 %v1233, %v1215
    %v1242 = vmul.f32 %v1237, %v1220
    %v1243 = vadd.f32 %v1134, %v1239
    %v1244 = vadd.f32 %v1135, %v1240
    %v1245 = vadd.f32 %v1136, %v1241
    %v1246 = vadd.f32 %v1137, %v1242
    %1247 = vmatprep.subr.mxu0 0.0
    %1248 = vmatpush1.msra.mxu0 0.0
    %1249 = vmatprep.subr.mxu0 0.0
    %1250 = vmatpush1.msra.mxu0 0.0
    %1251 = vmatprep.subr.mxu0 0.0
    %1252 = vmatpush1.msra.mxu0 0.0
    %1253 = vmatprep.subr.mxu0 0.0
    %1254 = vmatpush1.msra.mxu0 0.0
    %1255 = vmatprep.subr.mxu0 0.0
    %1256 = vmatpush1.msra.mxu0 0.0
    %1257 = vmatprep.subr.mxu0 0.0
    %1258 = vmatpush1.msra.mxu0 0.0
    %1259 = vmatprep.subr.mxu0 0.0
    %1260 = vmatpush1.msra.mxu0 0.0
    %1261 = vmatprep.subr.mxu0 0.0
    %1262 = vmatpush1.msra.mxu0 0.0
    %1263 = vmatprep.subr.mxu0 0.0
    %1264 = vmatpush1.msra.mxu0 0.0
    %1265 = vmatprep.subr.mxu0 0.0
    %1266 = vmatpush1.msra.mxu0 0.0
    %1267 = vmatprep.subr.mxu0 0.0
    %1268 = vmatpush1.msra.mxu0 0.0
    %1269 = vmatprep.subr.mxu0 0.0
    %1270 = vmatpush1.msra.mxu0 0.0
    %1271 = vmatprep.subr.mxu0 0.0
    %1272 = vmatpush1.msra.mxu0 0.0
    %1273 = vmatprep.subr.mxu0 0.0
    %1274 = vmatpush1.msra.mxu0 0.0
    %1275 = vmatprep.subr.mxu0 0.0
    %1276 = vmatpush1.msra.mxu0 0.0
    %1277 = vmatprep.subr.mxu0 0.0
    %1278 = vmatpush1.msra.mxu0 %v485
    %1279 = vmatprep.subr.mxu0 0.0
    %1280 = vmatpush2.msra.mxu0 0.0
    %1281 = vmatprep.subr.mxu0 0.0
    %1282 = vmatpush2.msra.mxu0 0.0
    %1283 = vmatprep.subr.mxu0 0.0
    %1284 = vmatpush2.msra.mxu0 0.0
    %1285 = vmatprep.subr.mxu0 0.0
    %1286 = vmatpush2.msra.mxu0 0.0
    %1287 = vmatprep.subr.mxu0 0.0
    %1288 = vmatpush2.msra.mxu0 0.0
    %1289 = vmatprep.subr.mxu0 0.0
    %1290 = vmatpush2.msra.mxu0 0.0
    %1291 = vmatprep.subr.mxu0 0.0
    %1292 = vmatpush2.msra.mxu0 0.0
    %1293 = vmatprep.subr.mxu0 0.0
    %1294 = vmatpush2.msra.mxu0 0.0
    %1295 = vmatprep.subr.mxu0 0.0
    %1296 = vmatpush2.msra.mxu0 0.0
    %1297 = vmatprep.subr.mxu0 0.0
    %1298 = vmatpush2.msra.mxu0 0.0
    %1299 = vmatprep.subr.mxu0 0.0
    %1300 = vmatpush2.msra.mxu0 0.0
    %1301 = vmatprep.subr.mxu0 0.0
    %1302 = vmatpush2.msra.mxu0 0.0
    %1303 = vmatprep.subr.mxu0 0.0
    %1304 = vmatpush2.msra.mxu0 0.0
    %1305 = vmatprep.subr.mxu0 0.0
    %1306 = vmatpush2.msra.mxu0 0.0
    %1307 = vmatprep.subr.mxu0 0.0
    %1308 = vmatpush2.msra.mxu0 0.0
    %1309 = vmatprep.subr.mxu0 0.0
    %1310 = vmatpush2.msra.mxu0 0.0
    %1311 = vmatprep.mubr.f32.mxu0 0.0
    %1312 = vmatmul.mubr.f32.gmra.mxu0 %v489
    %v1313 = vpop.f32.mrf.mxu0
    %v1314 = vadd.f32 0.0, %v1313
    %v1315 = vpop.f32.mrf.mxu0
    %1316 = vmatprep.mubr.f32.mxu0 0.0
    %1317 = vmatmul.mubr.f32.gmra.mxu0 %v492
    %v1318 = vpop.f32.mrf.mxu0
    %v1319 = vadd.f32 0.0, %v1318
    %v1320 = vpop.f32.mrf.mxu0
    %1321 = vmatprep.mubr.f32.mxu0 0.0
    %1322 = vmatmul.mubr.f32.gmra.mxu0 %v495
    %v1323 = vpop.f32.mrf.mxu0
    %v1324 = vadd.f32 0.0, %v1323
    %v1325 = vpop.f32.mrf.mxu0
    %1326 = vmatprep.mubr.f32.mxu0 0.0
    %1327 = vmatmul.mubr.f32.gmra.mxu0 %v498
    %v1328 = vpop.f32.mrf.mxu0
    %v1329 = vadd.f32 0.0, %v1328
    %v1330 = vpop.f32.mrf.mxu0
    %1331 = vdwg.mxu0
    %1332 = vset.pattern.permute.xlu0 6
    %1333 = vperm.xlu0 %1332, %v25
    %v1334 = vpop.permute.xlu0 %1333
    %1336 = vset.pattern.permute.xlu0 6
    %1337 = vperm.xlu0 %1336, %v26
    %v1338 = vpop.permute.xlu0 %1337
    %1340 = vset.pattern.permute.xlu0 6
    %1341 = vperm.xlu0 %1340, %v27
    %v1342 = vpop.permute.xlu0 %1341
    %1344 = vset.pattern.permute.xlu0 6
    %1345 = vperm.xlu0 %1344, %v28
    %v1346 = vpop.permute.xlu0 %1345
    %v1348 = vmul.f32 %v1334, %v1314
    %v1349 = vmul.f32 %v1338, %v1319
    %v1350 = vmul.f32 %v1342, %v1324
    %v1351 = vmul.f32 %v1346, %v1329
    %v1352 = vadd.f32 %v1243, %v1348
    %v1353 = vadd.f32 %v1244, %v1349
    %v1354 = vadd.f32 %v1245, %v1350
    %v1355 = vadd.f32 %v1246, %v1351
    %1356 = vmatprep.subr.mxu0 0.0
    %1357 = vmatpush1.msra.mxu0 0.0
    %1358 = vmatprep.subr.mxu0 0.0
    %1359 = vmatpush1.msra.mxu0 0.0
    %1360 = vmatprep.subr.mxu0 0.0
    %1361 = vmatpush1.msra.mxu0 0.0
    %1362 = vmatprep.subr.mxu0 0.0
    %1363 = vmatpush1.msra.mxu0 0.0
    %1364 = vmatprep.subr.mxu0 0.0
    %1365 = vmatpush1.msra.mxu0 0.0
    %1366 = vmatprep.subr.mxu0 0.0
    %1367 = vmatpush1.msra.mxu0 0.0
    %1368 = vmatprep.subr.mxu0 0.0
    %1369 = vmatpush1.msra.mxu0 0.0
    %1370 = vmatprep.subr.mxu0 0.0
    %1371 = vmatpush1.msra.mxu0 0.0
    %1372 = vmatprep.subr.mxu0 0.0
    %1373 = vmatpush1.msra.mxu0 0.0
    %1374 = vmatprep.subr.mxu0 0.0
    %1375 = vmatpush1.msra.mxu0 0.0
    %1376 = vmatprep.subr.mxu0 0.0
    %1377 = vmatpush1.msra.mxu0 0.0
    %1378 = vmatprep.subr.mxu0 0.0
    %1379 = vmatpush1.msra.mxu0 0.0
    %1380 = vmatprep.subr.mxu0 0.0
    %1381 = vmatpush1.msra.mxu0 0.0
    %1382 = vmatprep.subr.mxu0 0.0
    %1383 = vmatpush1.msra.mxu0 0.0
    %1384 = vmatprep.subr.mxu0 0.0
    %1385 = vmatpush1.msra.mxu0 0.0
    %1386 = vmatprep.subr.mxu0 0.0
    %1387 = vmatpush1.msra.mxu0 %v486
    %1388 = vmatprep.subr.mxu0 0.0
    %1389 = vmatpush2.msra.mxu0 0.0
    %1390 = vmatprep.subr.mxu0 0.0
    %1391 = vmatpush2.msra.mxu0 0.0
    %1392 = vmatprep.subr.mxu0 0.0
    %1393 = vmatpush2.msra.mxu0 0.0
    %1394 = vmatprep.subr.mxu0 0.0
    %1395 = vmatpush2.msra.mxu0 0.0
    %1396 = vmatprep.subr.mxu0 0.0
    %1397 = vmatpush2.msra.mxu0 0.0
    %1398 = vmatprep.subr.mxu0 0.0
    %1399 = vmatpush2.msra.mxu0 0.0
    %1400 = vmatprep.subr.mxu0 0.0
    %1401 = vmatpush2.msra.mxu0 0.0
    %1402 = vmatprep.subr.mxu0 0.0
    %1403 = vmatpush2.msra.mxu0 0.0
    %1404 = vmatprep.subr.mxu0 0.0
    %1405 = vmatpush2.msra.mxu0 0.0
    %1406 = vmatprep.subr.mxu0 0.0
    %1407 = vmatpush2.msra.mxu0 0.0
    %1408 = vmatprep.subr.mxu0 0.0
    %1409 = vmatpush2.msra.mxu0 0.0
    %1410 = vmatprep.subr.mxu0 0.0
    %1411 = vmatpush2.msra.mxu0 0.0
    %1412 = vmatprep.subr.mxu0 0.0
    %1413 = vmatpush2.msra.mxu0 0.0
    %1414 = vmatprep.subr.mxu0 0.0
    %1415 = vmatpush2.msra.mxu0 0.0
    %1416 = vmatprep.subr.mxu0 0.0
    %1417 = vmatpush2.msra.mxu0 0.0
    %1418 = vmatprep.subr.mxu0 0.0
    %1419 = vmatpush2.msra.mxu0 0.0
    %1420 = vmatprep.mubr.f32.mxu0 0.0
    %1421 = vmatmul.mubr.f32.gmra.mxu0 %v489
    %v1422 = vpop.f32.mrf.mxu0
    %v1423 = vadd.f32 0.0, %v1422
    %v1424 = vpop.f32.mrf.mxu0
    %1425 = vmatprep.mubr.f32.mxu0 0.0
    %1426 = vmatmul.mubr.f32.gmra.mxu0 %v492
    %v1427 = vpop.f32.mrf.mxu0
    %v1428 = vadd.f32 0.0, %v1427
    %v1429 = vpop.f32.mrf.mxu0
    %1430 = vmatprep.mubr.f32.mxu0 0.0
    %1431 = vmatmul.mubr.f32.gmra.mxu0 %v495
    %v1432 = vpop.f32.mrf.mxu0
    %v1433 = vadd.f32 0.0, %v1432
    %v1434 = vpop.f32.mrf.mxu0
    %1435 = vmatprep.mubr.f32.mxu0 0.0
    %1436 = vmatmul.mubr.f32.gmra.mxu0 %v498
    %v1437 = vpop.f32.mrf.mxu0
    %v1438 = vadd.f32 0.0, %v1437
    %v1439 = vpop.f32.mrf.mxu0
    %1440 = vdwg.mxu0
    %1441 = vset.pattern.permute.xlu0 7
    %1442 = vperm.xlu0 %1441, %v25
    %v1443 = vpop.permute.xlu0 %1442
    %1445 = vset.pattern.permute.xlu0 7
    %1446 = vperm.xlu0 %1445, %v26
    %v1447 = vpop.permute.xlu0 %1446
    %1449 = vset.pattern.permute.xlu0 7
    %1450 = vperm.xlu0 %1449, %v27
    %v1451 = vpop.permute.xlu0 %1450
    %1453 = vset.pattern.permute.xlu0 7
    %1454 = vperm.xlu0 %1453, %v28
    %v1455 = vpop.permute.xlu0 %1454
    %v1457 = vmul.f32 %v1443, %v1423
    %v1458 = vmul.f32 %v1447, %v1428
    %v1459 = vmul.f32 %v1451, %v1433
    %v1460 = vmul.f32 %v1455, %v1438
    %v1461 = vadd.f32 %v1352, %v1457
    %v1462 = vadd.f32 %v1353, %v1458
    %v1463 = vadd.f32 %v1354, %v1459
    %v1464 = vadd.f32 %v1355, %v1460
    %v1465 = vtanh.pop %v1461
    %v1466 = vtanh.pop %v1462
    %v1467 = vtanh.pop %v1463
    %v1468 = vtanh.pop %v1464
    %1469 = vxpose.xlu0.b32.start [1/16] %v1465, 128
    %1470 = vxpose.xlu0.b32.cont [2/16] %v1466, 128
    %1471 = vxpose.xlu0.b32.cont [3/16] 0.0, 128
    %1472 = vxpose.xlu0.b32.cont [4/16] 0.0, 128
    %1473 = vxpose.xlu0.b32.cont [5/16] 0.0, 128
    %1474 = vxpose.xlu0.b32.cont [6/16] 0.0, 128
    %1475 = vxpose.xlu0.b32.cont [7/16] 0.0, 128
    %1476 = vxpose.xlu0.b32.cont [8/16] 0.0, 128
    %1477 = vxpose.xlu0.b32.cont [9/16] 0.0, 128
    %1478 = vxpose.xlu0.b32.cont [10/16] 0.0, 128
    %1479 = vxpose.xlu0.b32.cont [11/16] 0.0, 128
    %1480 = vxpose.xlu0.b32.cont [12/16] 0.0, 128
    %1481 = vxpose.xlu0.b32.cont [13/16] 0.0, 128
    %1482 = vxpose.xlu0.b32.cont [14/16] 0.0, 128
    %1483 = vxpose.xlu0.b32.cont [15/16] 0.0, 128
    %1484 = vxpose.xlu0.b32.end [16/16] 0.0, 128
    %v1485 = vpop.trf.xlu0
    %v1486 = vpop.trf.xlu0
    %v1487 = vpop.trf.xlu0
    %v1488 = vpop.trf.xlu0
    %v1489 = vpop.trf.xlu0
    %v1490 = vpop.trf.xlu0
    %v1491 = vpop.trf.xlu0
    %v1492 = vpop.trf.xlu0
    %v1493 = vpop.trf.xlu0
    %v1494 = vpop.trf.xlu0
    %v1495 = vpop.trf.xlu0
    %v1496 = vpop.trf.xlu0
    %v1497 = vpop.trf.xlu0
    %v1498 = vpop.trf.xlu0
    %v1499 = vpop.trf.xlu0
    %v1500 = vpop.trf.xlu0
    %1501 = vxpose.xlu0.b32.start [1/16] %v1467, 128
    %1502 = vxpose.xlu0.b32.cont [2/16] %v1468, 128
    %1503 = vxpose.xlu0.b32.cont [3/16] 0.0, 128
    %1504 = vxpose.xlu0.b32.cont [4/16] 0.0, 128
    %1505 = vxpose.xlu0.b32.cont [5/16] 0.0, 128
    %1506 = vxpose.xlu0.b32.cont [6/16] 0.0, 128
    %1507 = vxpose.xlu0.b32.cont [7/16] 0.0, 128
    %1508 = vxpose.xlu0.b32.cont [8/16] 0.0, 128
    %1509 = vxpose.xlu0.b32.cont [9/16] 0.0, 128
    %1510 = vxpose.xlu0.b32.cont [10/16] 0.0, 128
    %1511 = vxpose.xlu0.b32.cont [11/16] 0.0, 128
    %1512 = vxpose.xlu0.b32.cont [12/16] 0.0, 128
    %1513 = vxpose.xlu0.b32.cont [13/16] 0.0, 128
    %1514 = vxpose.xlu0.b32.cont [14/16] 0.0, 128
    %1515 = vxpose.xlu0.b32.cont [15/16] 0.0, 128
    %1516 = vxpose.xlu0.b32.end [16/16] 0.0, 128
    %v1517 = vpop.trf.xlu0
    %v1518 = vpop.trf.xlu0
    %v1519 = vpop.trf.xlu0
    %v1520 = vpop.trf.xlu0
    %v1521 = vpop.trf.xlu0
    %v1522 = vpop.trf.xlu0
    %v1523 = vpop.trf.xlu0
    %v1524 = vpop.trf.xlu0
    %v1525 = vpop.trf.xlu0
    %v1526 = vpop.trf.xlu0
    %v1527 = vpop.trf.xlu0
    %v1528 = vpop.trf.xlu0
    %v1529 = vpop.trf.xlu0
    %v1530 = vpop.trf.xlu0
    %v1531 = vpop.trf.xlu0
    %v1532 = vpop.trf.xlu0
    %vm1533 = vcmask 125952
    %1534 = vst.msk [vmem:[#allocation2] sm:$0xf] %vm1533, %v1485
    %1535 = vst.msk [vmem:[#allocation2 + $0x4] sm:$0xf] %vm1533, %v1517
    // Predicated region
    $region22: #{tpu_custom_call.1} parent=1 // pred_check
      _
    $region23: #{tpu_custom_call.1} parent=1 // pred_check_branch
      %1537 = sbr.rel (0) target = $region25
    $region24: #{tpu_custom_call.1} parent=1 // pred_region
      %s1539 = ssub.s32 128, 128
      %1540 = vsyncadd [#allocation3], %s1539
      %s1541 = sshll.u32 [#allocation2], 4
      %s1542 = int_to_ptr.vmem [resolvable:$true] %s1541
      %1547 = dma.vmem_to_hbm [thread:$0]  %s1542, 128, %s5, [#allocation3], 64, 64, 4
    $region25: #{tpu_custom_call.1} parent=1 // pred_fallthru
      _
    // Predicated region
    $region26: #{tpu_custom_call.1} parent=1 // pred_check
      _
    $region27: #{tpu_custom_call.1} parent=1 // pred_check_branch
      %1549 = sbr.rel (0) target = $region29
    $region28: #{tpu_custom_call.1} parent=1 // pred_region
      %1550 = dma.done [#allocation3], 128
    $region29: #{tpu_custom_call.1} parent=1 // pred_fallthru
      _
    %1551 = vsyncpa [#allocation3], 1

</llo_original>
